<compile_context>
chip_gen: v5e
topology: v5e:2x2
jax: 0.10.0
libtpu: 0.0.40
codegen_flags: <defaults>
</compile_context>

<pallas_src>
import numpy as np
import jax
import jax.numpy as jnp
from jax.experimental import pallas as pl
from jax.experimental.pallas import tpu as pltpu

# ----------------------------------------------------------------------------
# Graph machinery (verbatim port of the PyTorch helpers)
# ----------------------------------------------------------------------------
sep = '/'

has_inputs = lambda node: type(node) is tuple


def normpath(path):
    parts = []
    for p in path.split(sep):
        if p == '..':
            parts.pop()
        elif p.startswith(sep):
            parts = [p]
        else:
            parts.append(p)
    return sep.join(parts)


def path_iter(nested_dict, pfx=()):
    for name, val in nested_dict.items():
        if isinstance(val, dict):
            yield from path_iter(val, (*pfx, name))
        else:
            yield ((*pfx, name), val)


def pipeline(net):
    return [(sep.join(path), node if has_inputs(node) else (node, [-1]))
            for path, node in path_iter(net)]


def build_graph(net):
    flattened = pipeline(net)
    resolve_input = lambda rel_path, path, idx: (
        normpath(sep.join((path, '..', rel_path))) if isinstance(rel_path, str)
        else flattened[idx + rel_path][0])
    return {path: (node[0],
                   [resolve_input(rel_path, path, idx) for rel_path in node[1]])
            for idx, (path, node) in enumerate(flattened)}


class Network:
    """JAX/Pallas analogue of the PyTorch `Network(nn.Module)` graph executor."""

    def __init__(self, net):
        self.graph = build_graph(net)
        for path, (val, _) in self.graph.items():
            setattr(self, path.replace('/', '_'), val)

    def nodes(self):
        return (node for node, _ in self.graph.values())

    def forward(self, inputs):
        outputs = dict(inputs)
        for k, (node, ins) in self.graph.items():
            if ins == ['suffix']:
                ins = ['input']
            if k not in outputs:
                outputs[k] = node(*[outputs[x] for x in ins])
        return outputs

    __call__ = forward

    # TODO(synk): Network.half() mutates module dtypes in place; not needed for
    # the forward pass and not replicated here.


# ----------------------------------------------------------------------------
# The single fused Pallas kernel (lane-dense, VMEM-resident intermediates)
# ----------------------------------------------------------------------------
def _fused_net_kernel(xt_ref, w1_ref, e1_ref, e1t_ref, g1_ref, b1_ref,
                      w2_ref, e2_ref, e2t_ref, g2_ref, b2_ref,
                      wfc_ref, bfc_ref, o_ref, xp2_ref, pooled_ref):
    # Shapes (all static):
    #   xt_ref     : (3, N*H, W*Cin)   height-shifted conv1 row taps (wrapper-built)
    #   w1_ref     : (3, W*Cin, W*C1)  width-Toeplitz conv1 weights (per dy)
    #   w2_ref     : (3, W*C1, W*C2)   width-Toeplitz conv2 weights (even|odd-w cols)
    #   e*_ref     : (C, L) channel->lane expand matrix; e*t_ref = its transpose
    #   g*/b*      : (1, C) BN affine params
    #   wfc_ref    : (Ho*Wo*C2, NCLS)  flatten-permuted FC weights (x0.125 folded)
    #   bfc_ref    : (1, NCLS)
    #   o_ref      : (N, NCLS)
    #   xp2_ref    : (N, H+2, W*C1)    height-padded conv2 input scratch
    #   pooled_ref : (N, Ho*Wo*C2)     lane-dense pooled slab for the single FC matmul
    N, Hp, L1 = xp2_ref.shape
    H = Hp - 2
    NH = N * H
    C1 = g1_ref.shape[1]
    C2 = g2_ref.shape[1]
    L2 = e2_ref.shape[1]
    Ho, Lp = H // 2, L2 // 2
    W = L1 // C1
    inv_cnt = 1.0 / float(N * H * W)

    def bn_relu(y, g_ref, b_ref, e_ref, et_ref):
        # Training-mode BatchNorm2d (batch stats, biased var, eps=1e-5) + ReLU.
        # One pass: per-lane sum / sum-of-squares, folded to per-channel with a
        # tiny (L, C) matmul so everything stays lane-dense (MXU is idle anyway).
        s = jnp.concatenate(
            [jnp.sum(y, axis=0, keepdims=True),
             jnp.sum(y * y, axis=0, keepdims=True)], axis=0)               # (2, L)
        sc = jnp.dot(s, et_ref[...],
                     preferred_element_type=jnp.float32) * inv_cnt         # (2, C)
        mean = sc[0:1, :]
        var = sc[1:2, :] - mean * mean
        inv_std = jax.lax.rsqrt(var + 1e-5)
        scale_c = g_ref[...] * inv_std                                     # (1, C)
        shift_c = b_ref[...] - mean * scale_c                              # (1, C)
        ps = jnp.dot(jnp.concatenate([scale_c, shift_c], axis=0),
                     e_ref[...], preferred_element_type=jnp.float32)       # (2, L)
        return jnp.maximum(y * ps[0:1, :] + ps[1:2, :], 0.0)

    # ---- conv1: three Toeplitz matmuls on pre-shifted row taps ----
    y1 = jnp.dot(xt_ref[0], w1_ref[0], preferred_element_type=jnp.float32)
    for dy in (1, 2):
        y1 = y1 + jnp.dot(xt_ref[dy], w1_ref[dy],
                          preferred_element_type=jnp.float32)
    a1 = bn_relu(y1, g1_ref, b1_ref, e1_ref, e1t_ref)                      # (NH, L1)

    # ---- conv2: height-pad a1 in VMEM (only the 2 halo rows are zeroed) ----
    zero_row = jnp.zeros((N, 1, L1), jnp.float32)
    xp2_ref[:, 0:1, :] = zero_row
    xp2_ref[:, Hp - 1:Hp, :] = zero_row
    xp2_ref[:, 1:H + 1, :] = a1.reshape(N, H, L1)
    y2 = None
    for dy in range(3):
        tap = xp2_ref[:, dy:dy + H, :].reshape(NH, L1)
        d = jnp.dot(tap, w2_ref[dy], preferred_element_type=jnp.float32)
        y2 = d if y2 is None else y2 + d
    a2 = bn_relu(y2, g2_ref, b2_ref, e2_ref, e2t_ref)                      # (NH, L2)

    # ---- 2x2 max-pool, entirely in registers ----
    a2r = a2.reshape(N, Ho, 2, L2)
    hm = jnp.maximum(a2r[:, :, 0, :], a2r[:, :, 1, :])                     # (N, Ho, L2)
    # conv2 output lanes are ordered (even-w | odd-w), so the width pool is a
    # max of two 128-lane-aligned halves; result lanes are already w'*C2 + c.
    pooled = jnp.maximum(hm[:, :, :Lp], hm[:, :, Lp:])                     # (N, Ho, Lp)
    for i in range(Ho):
        pooled_ref[:, i * Lp:(i + 1) * Lp] = pooled[:, i, :]               # aligned 128-lane stores

    # ---- classifier: single K = Ho*Wo*C2 matmul (flatten + x0.125 folded) ----
    logits = jnp.dot(pooled_ref[...], wfc_ref[...],
                     preferred_element_type=jnp.float32)
    o_ref[...] = (logits + bfc_ref[...]).astype(o_ref.dtype)


class FusedConvNet:
    """conv3x3->BN->ReLU -> conv3x3->BN->ReLU -> maxpool2x2 -> flatten(NCHW)
    -> linear -> x0.125, fused into ONE lane-dense Pallas TPU kernel."""

    def __init__(self, w1_hwio, g1, b1, w2_hwio, g2, b2, w_fc, b_fc,
                 alpha, spatial_hw):
        H, W = spatial_hw
        Ho, Wo = H // 2, W // 2
        kh, kw, cin, c1 = w1_hwio.shape
        c2 = w2_hwio.shape[3]
        ncls = w_fc.shape[1]
        assert (kh, kw) == (3, 3)
        assert w_fc.shape[0] == c2 * Ho * Wo, "FC weight / feature size mismatch"

        self.H, self.W, self.Ho, self.Wo = H, W, Ho, Wo
        self.cin, self.c1, self.c2, self.ncls = cin, c1, c2, ncls

        # Lane orderings (channels minor):
        #   conv1 output lane: w*c1 + co                           (natural)
        #   conv2 output lane: (w%2)*(Wo*c2) + (w//2)*c2 + co      (even|odd-w split
        #       -> 2x2 width-pool becomes max of two aligned 128-lane halves)
        col1 = lambda w, co: w * c1 + co
        col2 = lambda w, co: (w % 2) * (Wo * c2) + (w // 2) * c2 + co

        def toeplitz(w_hwio_, cin_, cout_, col_fn):
            # T[dy, w_in*cin + ci, col_fn(w, co)] = w_hwio[dy, dx, ci, co],
            # with w_in = w + dx - 1 (out-of-range taps are structural zeros,
            # which is exactly the conv's zero width-padding).
            wnp = np.asarray(w_hwio_, np.float32)
            T = np.zeros((3, W * cin_, W * cout_), np.float32)
            for dy in range(3):
                for w in range(W):
                    c0 = col_fn(w, 0)
                    for dx in range(3):
                        w_in = w + dx - 1
                        if 0 <= w_in < W:
                            T[dy, w_in * cin_:(w_in + 1) * cin_,
                              c0:c0 + cout_] = wnp[dy, dx]
            return jnp.asarray(T)

        def expand_mat(c, col_fn):
            E = np.zeros((c, W * c), np.float32)
            for w in range(W):
                for ch in range(c):
                    E[ch, col_fn(w, ch)] = 1.0
            return E

        self.w1t = toeplitz(w1_hwio, cin, c1, col1)          # (3, W*cin, W*c1)
        self.w2t = toeplitz(w2_hwio, c1, c2, col2)           # (3, W*c1,  W*c2)
        e1 = expand_mat(c1, col1)
        e2 = expand_mat(c2, col2)
        self.e1, self.e1t = jnp.asarray(e1), jnp.asarray(e1.T)
        self.e2, self.e2t = jnp.asarray(e2), jnp.asarray(e2.T)
        self.g1, self.b1, self.g2, self.b2 = g1, b1, g2, b2

        # Fold nn.Flatten's NCHW ordering and the Mul(alpha) node into the FC
        # weights/bias once at init.  pooled_ref feature index is
        # f = h'*(Wo*c2) + w'*c2 + c, PyTorch flatten index is c*Ho*Wo + h'*Wo + w'.
        w = w_fc.reshape(c2, Ho, Wo, ncls)
        w = jnp.transpose(w, (1, 2, 0, 3)).reshape(Ho * Wo * c2, ncls)
        self.wfc = alpha * w
        self.bfc = alpha * b_fc                               # (1, ncls)

    def __call__(self, x_nchw):
        N, Cin, H, W = x_nchw.shape
        assert (Cin, H, W) == (self.cin, self.H, self.W)
        c1, c2, Ho, Wo, ncls = self.c1, self.c2, self.Ho, self.Wo, self.ncls
        # Conv1 input prep in the wrapper (cheap XLA relayout): lane-dense
        # (N, H, W*Cin), height-pad, and pre-slice the three dy row taps.
        x_lane = jnp.transpose(x_nchw, (0, 2, 3, 1)).reshape(N, H, W * Cin)
        x_pad = jnp.pad(x_lane, ((0, 0), (1, 1), (0, 0)))
        x_taps = jnp.stack([x_pad[:, dy:dy + H, :].reshape(N * H, W * Cin)
                            for dy in range(3)], axis=0)      # (3, N*H, W*Cin)
        return pl.pallas_call(
            _fused_net_kernel,
            out_shape=jax.ShapeDtypeStruct((N, ncls), jnp.float32),
            scratch_shapes=[
                pltpu.VMEM((N, H + 2, W * c1), jnp.float32),   # height-padded act1
                pltpu.VMEM((N, Ho * Wo * c2), jnp.float32),    # lane-dense pooled slab
            ],
        )(x_taps, self.w1t, self.e1, self.e1t, self.g1, self.b1,
          self.w2t, self.e2, self.e2t, self.g2, self.b2, self.wfc, self.bfc)


# ----------------------------------------------------------------------------
# Pure-JAX (XLA) reference for numerical validation
# ----------------------------------------------------------------------------
def reference_forward(x_nchw, w1, g1, b1, w2, g2, b2, w_fc, b_fc, alpha):
    hp = jax.lax.Precision.HIGHEST
    x = jnp.transpose(x_nchw, (0, 2, 3, 1))

    def conv(x, w):
        return jax.lax.conv_general_dilated(
            x, w, window_strides=(1, 1), padding=((1, 1), (1, 1)),
            dimension_numbers=('NHWC', 'HWIO', 'NHWC'), precision=hp)

    def bn_relu(x, g, b):
        m = jnp.mean(x, axis=(0, 1, 2), keepdims=True)
        v = jnp.mean(jnp.square(x - m), axis=(0, 1, 2), keepdims=True)
        y = (x - m) * jax.lax.rsqrt(v + 1e-5) * g.reshape(1, 1, 1, -1) \
            + b.reshape(1, 1, 1, -1)
        return jnp.maximum(y, 0.0)

    y = bn_relu(conv(x, w1), g1, b1)
    y = bn_relu(conv(y, w2), g2, b2)
    n, h, w, c = y.shape
    y = jnp.max(y.reshape(n, h // 2, 2, w // 2, 2, c), axis=(2, 4))
    y_flat = jnp.transpose(y, (0, 3, 1, 2)).reshape(n, -1)   # nn.Flatten (NCHW)
    return alpha * (jnp.dot(y_flat, w_fc, precision=hp) + b_fc)


# ----------------------------------------------------------------------------
# Example instantiation & run
# ----------------------------------------------------------------------------
if __name__ == "__main__":
    key = jax.random.PRNGKey(0)
    kx, k1, k2, k3, k4, k5, k6, k7, k8 = jax.random.split(key, 9)

    N, Cin, H, W = 2, 4, 16, 16
    c1, c2, n_classes = 8, 16, 10
    Ho, Wo = H // 2, W // 2

    # External NCHW input (as a PyTorch nn.Conv2d would receive).
    x_nchw = jax.random.normal(kx, (N, Cin, H, W), jnp.float32)

    # Deterministic synthetic parameters.
    w1 = 0.1 * jax.random.normal(k1, (3, 3, Cin, c1), jnp.float32)   # HWIO
    w2 = 0.1 * jax.random.normal(k2, (3, 3, c1, c2), jnp.float32)    # HWIO
    g1 = 1.0 + 0.1 * jax.random.normal(k5, (1, c1), jnp.float32)
    b1 = 0.1 * jax.random.normal(k6, (1, c1), jnp.float32)
    g2 = 1.0 + 0.1 * jax.random.normal(k7, (1, c2), jnp.float32)
    b2 = 0.1 * jax.random.normal(k8, (1, c2), jnp.float32)
    feat = c2 * Ho * Wo
    w_fc = 0.05 * jax.random.normal(k3, (feat, n_classes), jnp.float32)
    b_fc = 0.05 * jax.random.normal(k4, (1, n_classes), jnp.float32)

    # Network instantiated with a single fused Pallas node (one launch,
    # lane-dense VMEM-resident intermediates, no inter-node HBM traffic).
    net = {
        'input': (None, []),
        'classifier': {
            'logits': FusedConvNet(w1, g1, b1, w2, g2, b2, w_fc, b_fc,
                                   alpha=0.125, spatial_hw=(H, W)),
        },
    }
    model = Network(net)

    fwd = jax.jit(lambda x: model({'input': x})['classifier/logits'])
    logits = fwd(x_nchw)
    jax.block_until_ready(logits)

    assert logits.shape == (N, n_classes), logits.shape
    assert bool(jnp.all(jnp.isfinite(logits)))

    ref = reference_forward(x_nchw, w1, g1, b1, w2, g2, b2, w_fc, b_fc, 0.125)
    jax.block_until_ready(ref)
    max_err = float(jnp.max(jnp.abs(logits - ref)))
    assert max_err < 5e-3, f"mismatch vs XLA reference: max_err={max_err}"

    print("KERNEL_OK")
</pallas_src>

<mosaic_0001>
module attributes {stable_mosaic.version = 11 : i64} {
  func.func @_fused_net_kernel(%arg0: memref<3x32x64xf32, #tpu.memory_space<vmem>>, %arg1: memref<3x64x128xf32, #tpu.memory_space<vmem>>, %arg2: memref<8x128xf32, #tpu.memory_space<vmem>>, %arg3: memref<128x8xf32, #tpu.memory_space<vmem>>, %arg4: memref<1x8xf32, #tpu.memory_space<vmem>>, %arg5: memref<1x8xf32, #tpu.memory_space<vmem>>, %arg6: memref<3x128x256xf32, #tpu.memory_space<vmem>>, %arg7: memref<16x256xf32, #tpu.memory_space<vmem>>, %arg8: memref<256x16xf32, #tpu.memory_space<vmem>>, %arg9: memref<1x16xf32, #tpu.memory_space<vmem>>, %arg10: memref<1x16xf32, #tpu.memory_space<vmem>>, %arg11: memref<1024x10xf32, #tpu.memory_space<vmem>>, %arg12: memref<1x10xf32, #tpu.memory_space<vmem>>, %arg13: memref<2x10xf32, #tpu.memory_space<vmem>>, %arg14: memref<2x18x128xf32, #tpu.memory_space<vmem>>, %arg15: memref<2x1024xf32, #tpu.memory_space<vmem>>) attributes {dimension_semantics = [], scalar_prefetch = 0 : i64, scratch_operands = 2 : i64, tpu.core_type = #tpu.core_type<tc>} {
    %c0 = arith.constant 0 : index
    %c0_0 = arith.constant 0 : index
    %c0_1 = arith.constant 0 : index
    %0 = vector.load %arg0[%c0, %c0_0, %c0_1] : memref<3x32x64xf32, #tpu.memory_space<vmem>>, vector<1x32x64xf32>
    %1 = vector.shape_cast %0 : vector<1x32x64xf32> to vector<32x64xf32>
    %c0_2 = arith.constant 0 : index
    %c0_3 = arith.constant 0 : index
    %c0_4 = arith.constant 0 : index
    %2 = vector.load %arg1[%c0_2, %c0_3, %c0_4] : memref<3x64x128xf32, #tpu.memory_space<vmem>>, vector<1x64x128xf32>
    %3 = vector.shape_cast %2 : vector<1x64x128xf32> to vector<64x128xf32>
    %cst = arith.constant dense<0.000000e+00> : vector<32x128xf32>
    %4 = tpu.matmul %1, %3, %cst {dimension_numbers = #tpu.dot_dimension_numbers<[1], [0], [0], [1], [0, 0, 1, 1], [], []>} : vector<32x64xf32>, vector<64x128xf32>, vector<32x128xf32> -> vector<32x128xf32>
    %c1 = arith.constant 1 : index
    %c0_5 = arith.constant 0 : index
    %c0_6 = arith.constant 0 : index
    %5 = vector.load %arg0[%c1, %c0_5, %c0_6] : memref<3x32x64xf32, #tpu.memory_space<vmem>>, vector<1x32x64xf32>
    %6 = vector.shape_cast %5 : vector<1x32x64xf32> to vector<32x64xf32>
    %c1_7 = arith.constant 1 : index
    %c0_8 = arith.constant 0 : index
    %c0_9 = arith.constant 0 : index
    %7 = vector.load %arg1[%c1_7, %c0_8, %c0_9] : memref<3x64x128xf32, #tpu.memory_space<vmem>>, vector<1x64x128xf32>
    %8 = vector.shape_cast %7 : vector<1x64x128xf32> to vector<64x128xf32>
    %cst_10 = arith.constant dense<0.000000e+00> : vector<32x128xf32>
    %9 = tpu.matmul %6, %8, %cst_10 {dimension_numbers = #tpu.dot_dimension_numbers<[1], [0], [0], [1], [0, 0, 1, 1], [], []>} : vector<32x64xf32>, vector<64x128xf32>, vector<32x128xf32> -> vector<32x128xf32>
    %10 = arith.addf %4, %9 : vector<32x128xf32>
    %c2 = arith.constant 2 : index
    %c0_11 = arith.constant 0 : index
    %c0_12 = arith.constant 0 : index
    %11 = vector.load %arg0[%c2, %c0_11, %c0_12] : memref<3x32x64xf32, #tpu.memory_space<vmem>>, vector<1x32x64xf32>
    %12 = vector.shape_cast %11 : vector<1x32x64xf32> to vector<32x64xf32>
    %c2_13 = arith.constant 2 : index
    %c0_14 = arith.constant 0 : index
    %c0_15 = arith.constant 0 : index
    %13 = vector.load %arg1[%c2_13, %c0_14, %c0_15] : memref<3x64x128xf32, #tpu.memory_space<vmem>>, vector<1x64x128xf32>
    %14 = vector.shape_cast %13 : vector<1x64x128xf32> to vector<64x128xf32>
    %cst_16 = arith.constant dense<0.000000e+00> : vector<32x128xf32>
    %15 = tpu.matmul %12, %14, %cst_16 {dimension_numbers = #tpu.dot_dimension_numbers<[1], [0], [0], [1], [0, 0, 1, 1], [], []>} : vector<32x64xf32>, vector<64x128xf32>, vector<32x128xf32> -> vector<32x128xf32>
    %16 = arith.addf %10, %15 : vector<32x128xf32>
    %cst_17 = arith.constant dense<0.000000e+00> : vector<128xf32>
    %17 = vector.multi_reduction <add>, %16, %cst_17 [0] : vector<32x128xf32> to vector<128xf32>
    %18 = vector.shape_cast %17 : vector<128xf32> to vector<1x128xf32>
    %19 = arith.mulf %16, %16 : vector<32x128xf32>
    %cst_18 = arith.constant dense<0.000000e+00> : vector<128xf32>
    %20 = vector.multi_reduction <add>, %19, %cst_18 [0] : vector<32x128xf32> to vector<128xf32>
    %21 = vector.shape_cast %20 : vector<128xf32> to vector<1x128xf32>
    %22 = tpu.concatenate %18, %21 in 0 : vector<1x128xf32>, vector<1x128xf32> -> vector<2x128xf32>
    %c0_19 = arith.constant 0 : index
    %c0_20 = arith.constant 0 : index
    %23 = vector.load %arg3[%c0_19, %c0_20] : memref<128x8xf32, #tpu.memory_space<vmem>>, vector<128x8xf32>
    %cst_21 = arith.constant dense<0.000000e+00> : vector<2x8xf32>
    %24 = tpu.matmul %22, %23, %cst_21 {dimension_numbers = #tpu.dot_dimension_numbers<[1], [0], [0], [1], [0, 0, 1, 1], [], []>} : vector<2x128xf32>, vector<128x8xf32>, vector<2x8xf32> -> vector<2x8xf32>
    %cst_22 = arith.constant 0.001953125 : f32
    %25 = vector.broadcast %cst_22 : f32 to vector<2x8xf32>
    %26 = arith.mulf %24, %25 : vector<2x8xf32>
    %27 = vector.extract_strided_slice %26 {offsets = [0, 0], sizes = [1, 8], strides = [1, 1]} : vector<2x8xf32> to vector<1x8xf32>
    %28 = vector.extract_strided_slice %26 {offsets = [1, 0], sizes = [1, 8], strides = [1, 1]} : vector<2x8xf32> to vector<1x8xf32>
    %29 = arith.mulf %27, %27 : vector<1x8xf32>
    %30 = arith.subf %28, %29 : vector<1x8xf32>
    %cst_23 = arith.constant 9.99999974E-6 : f32
    %31 = vector.broadcast %cst_23 : f32 to vector<1x8xf32>
    %32 = arith.addf %30, %31 : vector<1x8xf32>
    %33 = math.rsqrt %32 : vector<1x8xf32>
    %c0_24 = arith.constant 0 : index
    %c0_25 = arith.constant 0 : index
    %34 = vector.load %arg4[%c0_24, %c0_25] : memref<1x8xf32, #tpu.memory_space<vmem>>, vector<1x8xf32>
    %35 = arith.mulf %34, %33 : vector<1x8xf32>
    %c0_26 = arith.constant 0 : index
    %c0_27 = arith.constant 0 : index
    %36 = vector.load %arg5[%c0_26, %c0_27] : memref<1x8xf32, #tpu.memory_space<vmem>>, vector<1x8xf32>
    %37 = arith.mulf %27, %35 : vector<1x8xf32>
    %38 = arith.subf %36, %37 : vector<1x8xf32>
    %39 = tpu.concatenate %35, %38 in 0 : vector<1x8xf32>, vector<1x8xf32> -> vector<2x8xf32>
    %c0_28 = arith.constant 0 : index
    %c0_29 = arith.constant 0 : index
    %40 = vector.load %arg2[%c0_28, %c0_29] : memref<8x128xf32, #tpu.memory_space<vmem>>, vector<8x128xf32>
    %cst_30 = arith.constant dense<0.000000e+00> : vector<2x128xf32>
    %41 = tpu.matmul %39, %40, %cst_30 {dimension_numbers = #tpu.dot_dimension_numbers<[1], [0], [0], [1], [0, 0, 1, 1], [], []>} : vector<2x8xf32>, vector<8x128xf32>, vector<2x128xf32> -> vector<2x128xf32>
    %42 = vector.extract_strided_slice %41 {offsets = [0, 0], sizes = [1, 128], strides = [1, 1]} : vector<2x128xf32> to vector<1x128xf32>
    %43 = vector.broadcast %42 : vector<1x128xf32> to vector<32x128xf32>
    %44 = arith.mulf %16, %43 : vector<32x128xf32>
    %45 = vector.extract_strided_slice %41 {offsets = [1, 0], sizes = [1, 128], strides = [1, 1]} : vector<2x128xf32> to vector<1x128xf32>
    %46 = vector.broadcast %45 : vector<1x128xf32> to vector<32x128xf32>
    %47 = arith.addf %44, %46 : vector<32x128xf32>
    %cst_31 = arith.constant 0.000000e+00 : f32
    %48 = vector.broadcast %cst_31 : f32 to vector<32x128xf32>
    %49 = arith.maximumf %47, %48 : vector<32x128xf32>
    %cst_32 = arith.constant 0.000000e+00 : f32
    %50 = vector.broadcast %cst_32 : f32 to vector<2x1x128xf32>
    %c0_33 = arith.constant 0 : index
    %c0_34 = arith.constant 0 : index
    %c0_35 = arith.constant 0 : index
    %51 = vector.load %arg14[%c0_33, %c0_34, %c0_35] : memref<2x18x128xf32, #tpu.memory_space<vmem>>, vector<2x1x128xf32>
    tpu.vector_store %arg14[%c0_33, %c0_34, %c0_35], %50 {strides = array<i32>} : memref<2x18x128xf32, #tpu.memory_space<vmem>>, vector<2x1x128xf32>,
    %c0_36 = arith.constant 0 : index
    %c17 = arith.constant 17 : index
    %c0_37 = arith.constant 0 : index
    %52 = vector.load %arg14[%c0_36, %c17, %c0_37] : memref<2x18x128xf32, #tpu.memory_space<vmem>>, vector<2x1x128xf32>
    tpu.vector_store %arg14[%c0_36, %c17, %c0_37], %50 {strides = array<i32>} : memref<2x18x128xf32, #tpu.memory_space<vmem>>, vector<2x1x128xf32>,
    %53 = vector.shape_cast %49 : vector<32x128xf32> to vector<2x16x128xf32>
    %c0_38 = arith.constant 0 : index
    %c1_39 = arith.constant 1 : index
    %c0_40 = arith.constant 0 : index
    %54 = vector.load %arg14[%c0_38, %c1_39, %c0_40] : memref<2x18x128xf32, #tpu.memory_space<vmem>>, vector<2x16x128xf32>
    tpu.vector_store %arg14[%c0_38, %c1_39, %c0_40], %53 {strides = array<i32>} : memref<2x18x128xf32, #tpu.memory_space<vmem>>, vector<2x16x128xf32>,
    %c0_41 = arith.constant 0 : index
    %c0_42 = arith.constant 0 : index
    %c0_43 = arith.constant 0 : index
    %55 = vector.load %arg14[%c0_41, %c0_42, %c0_43] : memref<2x18x128xf32, #tpu.memory_space<vmem>>, vector<2x16x128xf32>
    %56 = vector.shape_cast %55 : vector<2x16x128xf32> to vector<32x128xf32>
    %c0_44 = arith.constant 0 : index
    %c0_45 = arith.constant 0 : index
    %c0_46 = arith.constant 0 : index
    %57 = vector.load %arg6[%c0_44, %c0_45, %c0_46] : memref<3x128x256xf32, #tpu.memory_space<vmem>>, vector<1x128x256xf32>
    %58 = vector.shape_cast %57 : vector<1x128x256xf32> to vector<128x256xf32>
    %cst_47 = arith.constant dense<0.000000e+00> : vector<32x256xf32>
    %59 = tpu.matmul %56, %58, %cst_47 {dimension_numbers = #tpu.dot_dimension_numbers<[1], [0], [0], [1], [0, 0, 1, 1], [], []>} : vector<32x128xf32>, vector<128x256xf32>, vector<32x256xf32> -> vector<32x256xf32>
    %c0_48 = arith.constant 0 : index
    %c1_49 = arith.constant 1 : index
    %c0_50 = arith.constant 0 : index
    %60 = vector.load %arg14[%c0_48, %c1_49, %c0_50] : memref<2x18x128xf32, #tpu.memory_space<vmem>>, vector<2x16x128xf32>
    %61 = vector.shape_cast %60 : vector<2x16x128xf32> to vector<32x128xf32>
    %c1_51 = arith.constant 1 : index
    %c0_52 = arith.constant 0 : index
    %c0_53 = arith.constant 0 : index
    %62 = vector.load %arg6[%c1_51, %c0_52, %c0_53] : memref<3x128x256xf32, #tpu.memory_space<vmem>>, vector<1x128x256xf32>
    %63 = vector.shape_cast %62 : vector<1x128x256xf32> to vector<128x256xf32>
    %cst_54 = arith.constant dense<0.000000e+00> : vector<32x256xf32>
    %64 = tpu.matmul %61, %63, %cst_54 {dimension_numbers = #tpu.dot_dimension_numbers<[1], [0], [0], [1], [0, 0, 1, 1], [], []>} : vector<32x128xf32>, vector<128x256xf32>, vector<32x256xf32> -> vector<32x256xf32>
    %65 = arith.addf %59, %64 : vector<32x256xf32>
    %c0_55 = arith.constant 0 : index
    %c2_56 = arith.constant 2 : index
    %c0_57 = arith.constant 0 : index
    %66 = vector.load %arg14[%c0_55, %c2_56, %c0_57] : memref<2x18x128xf32, #tpu.memory_space<vmem>>, vector<2x16x128xf32>
    %67 = vector.shape_cast %66 : vector<2x16x128xf32> to vector<32x128xf32>
    %c2_58 = arith.constant 2 : index
    %c0_59 = arith.constant 0 : index
    %c0_60 = arith.constant 0 : index
    %68 = vector.load %arg6[%c2_58, %c0_59, %c0_60] : memref<3x128x256xf32, #tpu.memory_space<vmem>>, vector<1x128x256xf32>
    %69 = vector.shape_cast %68 : vector<1x128x256xf32> to vector<128x256xf32>
    %cst_61 = arith.constant dense<0.000000e+00> : vector<32x256xf32>
    %70 = tpu.matmul %67, %69, %cst_61 {dimension_numbers = #tpu.dot_dimension_numbers<[1], [0], [0], [1], [0, 0, 1, 1], [], []>} : vector<32x128xf32>, vector<128x256xf32>, vector<32x256xf32> -> vector<32x256xf32>
    %71 = arith.addf %65, %70 : vector<32x256xf32>
    %cst_62 = arith.constant dense<0.000000e+00> : vector<256xf32>
    %72 = vector.multi_reduction <add>, %71, %cst_62 [0] : vector<32x256xf32> to vector<256xf32>
    %73 = vector.shape_cast %72 : vector<256xf32> to vector<1x256xf32>
    %74 = arith.mulf %71, %71 : vector<32x256xf32>
    %cst_63 = arith.constant dense<0.000000e+00> : vector<256xf32>
    %75 = vector.multi_reduction <add>, %74, %cst_63 [0] : vector<32x256xf32> to vector<256xf32>
    %76 = vector.shape_cast %75 : vector<256xf32> to vector<1x256xf32>
    %77 = tpu.concatenate %73, %76 in 0 : vector<1x256xf32>, vector<1x256xf32> -> vector<2x256xf32>
    %c0_64 = arith.constant 0 : index
    %c0_65 = arith.constant 0 : index
    %78 = vector.load %arg8[%c0_64, %c0_65] : memref<256x16xf32, #tpu.memory_space<vmem>>, vector<256x16xf32>
    %cst_66 = arith.constant dense<0.000000e+00> : vector<2x16xf32>
    %79 = tpu.matmul %77, %78, %cst_66 {dimension_numbers = #tpu.dot_dimension_numbers<[1], [0], [0], [1], [0, 0, 1, 1], [], []>} : vector<2x256xf32>, vector<256x16xf32>, vector<2x16xf32> -> vector<2x16xf32>
    %cst_67 = arith.constant 0.001953125 : f32
    %80 = vector.broadcast %cst_67 : f32 to vector<2x16xf32>
    %81 = arith.mulf %79, %80 : vector<2x16xf32>
    %82 = vector.extract_strided_slice %81 {offsets = [0, 0], sizes = [1, 16], strides = [1, 1]} : vector<2x16xf32> to vector<1x16xf32>
    %83 = vector.extract_strided_slice %81 {offsets = [1, 0], sizes = [1, 16], strides = [1, 1]} : vector<2x16xf32> to vector<1x16xf32>
    %84 = arith.mulf %82, %82 : vector<1x16xf32>
    %85 = arith.subf %83, %84 : vector<1x16xf32>
    %cst_68 = arith.constant 9.99999974E-6 : f32
    %86 = vector.broadcast %cst_68 : f32 to vector<1x16xf32>
    %87 = arith.addf %85, %86 : vector<1x16xf32>
    %88 = math.rsqrt %87 : vector<1x16xf32>
    %c0_69 = arith.constant 0 : index
    %c0_70 = arith.constant 0 : index
    %89 = vector.load %arg9[%c0_69, %c0_70] : memref<1x16xf32, #tpu.memory_space<vmem>>, vector<1x16xf32>
    %90 = arith.mulf %89, %88 : vector<1x16xf32>
    %c0_71 = arith.constant 0 : index
    %c0_72 = arith.constant 0 : index
    %91 = vector.load %arg10[%c0_71, %c0_72] : memref<1x16xf32, #tpu.memory_space<vmem>>, vector<1x16xf32>
    %92 = arith.mulf %82, %90 : vector<1x16xf32>
    %93 = arith.subf %91, %92 : vector<1x16xf32>
    %94 = tpu.concatenate %90, %93 in 0 : vector<1x16xf32>, vector<1x16xf32> -> vector<2x16xf32>
    %c0_73 = arith.constant 0 : index
    %c0_74 = arith.constant 0 : index
    %95 = vector.load %arg7[%c0_73, %c0_74] : memref<16x256xf32, #tpu.memory_space<vmem>>, vector<16x256xf32>
    %cst_75 = arith.constant dense<0.000000e+00> : vector<2x256xf32>
    %96 = tpu.matmul %94, %95, %cst_75 {dimension_numbers = #tpu.dot_dimension_numbers<[1], [0], [0], [1], [0, 0, 1, 1], [], []>} : vector<2x16xf32>, vector<16x256xf32>, vector<2x256xf32> -> vector<2x256xf32>
    %97 = vector.extract_strided_slice %96 {offsets = [0, 0], sizes = [1, 256], strides = [1, 1]} : vector<2x256xf32> to vector<1x256xf32>
    %98 = vector.broadcast %97 : vector<1x256xf32> to vector<32x256xf32>
    %99 = arith.mulf %71, %98 : vector<32x256xf32>
    %100 = vector.extract_strided_slice %96 {offsets = [1, 0], sizes = [1, 256], strides = [1, 1]} : vector<2x256xf32> to vector<1x256xf32>
    %101 = vector.broadcast %100 : vector<1x256xf32> to vector<32x256xf32>
    %102 = arith.addf %99, %101 : vector<32x256xf32>
    %cst_76 = arith.constant 0.000000e+00 : f32
    %103 = vector.broadcast %cst_76 : f32 to vector<32x256xf32>
    %104 = arith.maximumf %102, %103 : vector<32x256xf32>
    %105 = vector.shape_cast %104 : vector<32x256xf32> to vector<2x8x2x256xf32>
    %106 = vector.extract_strided_slice %105 {offsets = [0, 0, 0, 0], sizes = [2, 8, 1, 256], strides = [1, 1, 1, 1]} : vector<2x8x2x256xf32> to vector<2x8x1x256xf32>
    %107 = vector.shape_cast %106 : vector<2x8x1x256xf32> to vector<2x8x256xf32>
    %108 = vector.extract_strided_slice %105 {offsets = [0, 0, 1, 0], sizes = [2, 8, 1, 256], strides = [1, 1, 1, 1]} : vector<2x8x2x256xf32> to vector<2x8x1x256xf32>
    %109 = vector.shape_cast %108 : vector<2x8x1x256xf32> to vector<2x8x256xf32>
    %110 = arith.maximumf %107, %109 : vector<2x8x256xf32>
    %111 = vector.extract_strided_slice %110 {offsets = [0, 0, 0], sizes = [2, 8, 128], strides = [1, 1, 1]} : vector<2x8x256xf32> to vector<2x8x128xf32>
    %112 = vector.extract_strided_slice %110 {offsets = [0, 0, 128], sizes = [2, 8, 128], strides = [1, 1, 1]} : vector<2x8x256xf32> to vector<2x8x128xf32>
    %113 = arith.maximumf %111, %112 : vector<2x8x128xf32>
    %114 = vector.extract_strided_slice %113 {offsets = [0, 0, 0], sizes = [2, 1, 128], strides = [1, 1, 1]} : vector<2x8x128xf32> to vector<2x1x128xf32>
    %115 = vector.shape_cast %114 : vector<2x1x128xf32> to vector<2x128xf32>
    %c0_77 = arith.constant 0 : index
    %c0_78 = arith.constant 0 : index
    %116 = vector.load %arg15[%c0_77, %c0_78] : memref<2x1024xf32, #tpu.memory_space<vmem>>, vector<2x128xf32>
    tpu.vector_store %arg15[%c0_77, %c0_78], %115 {strides = array<i32>} : memref<2x1024xf32, #tpu.memory_space<vmem>>, vector<2x128xf32>,
    %117 = vector.extract_strided_slice %113 {offsets = [0, 1, 0], sizes = [2, 1, 128], strides = [1, 1, 1]} : vector<2x8x128xf32> to vector<2x1x128xf32>
    %118 = vector.shape_cast %117 : vector<2x1x128xf32> to vector<2x128xf32>
    %c0_79 = arith.constant 0 : index
    %c128 = arith.constant 128 : index
    %119 = vector.load %arg15[%c0_79, %c128] : memref<2x1024xf32, #tpu.memory_space<vmem>>, vector<2x128xf32>
    tpu.vector_store %arg15[%c0_79, %c128], %118 {strides = array<i32>} : memref<2x1024xf32, #tpu.memory_space<vmem>>, vector<2x128xf32>,
    %120 = vector.extract_strided_slice %113 {offsets = [0, 2, 0], sizes = [2, 1, 128], strides = [1, 1, 1]} : vector<2x8x128xf32> to vector<2x1x128xf32>
    %121 = vector.shape_cast %120 : vector<2x1x128xf32> to vector<2x128xf32>
    %c0_80 = arith.constant 0 : index
    %c256 = arith.constant 256 : index
    %122 = vector.load %arg15[%c0_80, %c256] : memref<2x1024xf32, #tpu.memory_space<vmem>>, vector<2x128xf32>
    tpu.vector_store %arg15[%c0_80, %c256], %121 {strides = array<i32>} : memref<2x1024xf32, #tpu.memory_space<vmem>>, vector<2x128xf32>,
    %123 = vector.extract_strided_slice %113 {offsets = [0, 3, 0], sizes = [2, 1, 128], strides = [1, 1, 1]} : vector<2x8x128xf32> to vector<2x1x128xf32>
    %124 = vector.shape_cast %123 : vector<2x1x128xf32> to vector<2x128xf32>
    %c0_81 = arith.constant 0 : index
    %c384 = arith.constant 384 : index
    %125 = vector.load %arg15[%c0_81, %c384] : memref<2x1024xf32, #tpu.memory_space<vmem>>, vector<2x128xf32>
    tpu.vector_store %arg15[%c0_81, %c384], %124 {strides = array<i32>} : memref<2x1024xf32, #tpu.memory_space<vmem>>, vector<2x128xf32>,
    %126 = vector.extract_strided_slice %113 {offsets = [0, 4, 0], sizes = [2, 1, 128], strides = [1, 1, 1]} : vector<2x8x128xf32> to vector<2x1x128xf32>
    %127 = vector.shape_cast %126 : vector<2x1x128xf32> to vector<2x128xf32>
    %c0_82 = arith.constant 0 : index
    %c512 = arith.constant 512 : index
    %128 = vector.load %arg15[%c0_82, %c512] : memref<2x1024xf32, #tpu.memory_space<vmem>>, vector<2x128xf32>
    tpu.vector_store %arg15[%c0_82, %c512], %127 {strides = array<i32>} : memref<2x1024xf32, #tpu.memory_space<vmem>>, vector<2x128xf32>,
    %129 = vector.extract_strided_slice %113 {offsets = [0, 5, 0], sizes = [2, 1, 128], strides = [1, 1, 1]} : vector<2x8x128xf32> to vector<2x1x128xf32>
    %130 = vector.shape_cast %129 : vector<2x1x128xf32> to vector<2x128xf32>
    %c0_83 = arith.constant 0 : index
    %c640 = arith.constant 640 : index
    %131 = vector.load %arg15[%c0_83, %c640] : memref<2x1024xf32, #tpu.memory_space<vmem>>, vector<2x128xf32>
    tpu.vector_store %arg15[%c0_83, %c640], %130 {strides = array<i32>} : memref<2x1024xf32, #tpu.memory_space<vmem>>, vector<2x128xf32>,
    %132 = vector.extract_strided_slice %113 {offsets = [0, 6, 0], sizes = [2, 1, 128], strides = [1, 1, 1]} : vector<2x8x128xf32> to vector<2x1x128xf32>
    %133 = vector.shape_cast %132 : vector<2x1x128xf32> to vector<2x128xf32>
    %c0_84 = arith.constant 0 : index
    %c768 = arith.constant 768 : index
    %134 = vector.load %arg15[%c0_84, %c768] : memref<2x1024xf32, #tpu.memory_space<vmem>>, vector<2x128xf32>
    tpu.vector_store %arg15[%c0_84, %c768], %133 {strides = array<i32>} : memref<2x1024xf32, #tpu.memory_space<vmem>>, vector<2x128xf32>,
    %135 = vector.extract_strided_slice %113 {offsets = [0, 7, 0], sizes = [2, 1, 128], strides = [1, 1, 1]} : vector<2x8x128xf32> to vector<2x1x128xf32>
    %136 = vector.shape_cast %135 : vector<2x1x128xf32> to vector<2x128xf32>
    %c0_85 = arith.constant 0 : index
    %c896 = arith.constant 896 : index
    %137 = vector.load %arg15[%c0_85, %c896] : memref<2x1024xf32, #tpu.memory_space<vmem>>, vector<2x128xf32>
    tpu.vector_store %arg15[%c0_85, %c896], %136 {strides = array<i32>} : memref<2x1024xf32, #tpu.memory_space<vmem>>, vector<2x128xf32>,
    %c0_86 = arith.constant 0 : index
    %c0_87 = arith.constant 0 : index
    %138 = vector.load %arg15[%c0_86, %c0_87] : memref<2x1024xf32, #tpu.memory_space<vmem>>, vector<2x1024xf32>
    %c0_88 = arith.constant 0 : index
    %c0_89 = arith.constant 0 : index
    %139 = vector.load %arg11[%c0_88, %c0_89] : memref<1024x10xf32, #tpu.memory_space<vmem>>, vector<1024x10xf32>
    %cst_90 = arith.constant dense<0.000000e+00> : vector<2x10xf32>
    %140 = tpu.matmul %138, %139, %cst_90 {dimension_numbers = #tpu.dot_dimension_numbers<[1], [0], [0], [1], [0, 0, 1, 1], [], []>} : vector<2x1024xf32>, vector<1024x10xf32>, vector<2x10xf32> -> vector<2x10xf32>
    %c0_91 = arith.constant 0 : index
    %c0_92 = arith.constant 0 : index
    %141 = vector.load %arg12[%c0_91, %c0_92] : memref<1x10xf32, #tpu.memory_space<vmem>>, vector<1x10xf32>
    %142 = vector.broadcast %141 : vector<1x10xf32> to vector<2x10xf32>
    %143 = arith.addf %140, %142 : vector<2x10xf32>
    %c0_93 = arith.constant 0 : index
    %c0_94 = arith.constant 0 : index
    %144 = vector.load %arg13[%c0_93, %c0_94] : memref<2x10xf32, #tpu.memory_space<vmem>>, vector<2x10xf32>
    tpu.vector_store %arg13[%c0_93, %c0_94], %143 {strides = array<i32>} : memref<2x10xf32, #tpu.memory_space<vmem>>, vector<2x10xf32>,
    return
  }
}

</mosaic_0001>

<llo_original>
// kernel: _lambda_.1
$region0: #{_lambda_.1}
  #allocation0 [shape = 'u32[]', space=smem, size = 0x4, offset = 0x4, fixed_abs, tag = 'smem constant byte address 0x4 - core index']
  #allocation1 [shape = 'u32[72,128]{1,0:T(1,128)}', space=vmem, size = 0x9000, scoped, tag = 'internal scratch']
  #allocation2 [shape = 'f32[2,18,128]{2,1,0:T(8,128)}', space=vmem, size = 0x6000, scoped, tag = 'scratch operand']
  #allocation3 [shape = 'f32[2,1024]{1,0:T(2,128)}', space=vmem, size = 0x2000, scoped, tag = 'scratch operand']
  %s0 = inlined_call_operand.vmem [shape: f32[3,32,64], index: 0, kind: input, shape index: {}]
  %s1 = inlined_call_operand.vmem [shape: f32[3,64,128], index: 1, kind: input, shape index: {}]
  %s2 = inlined_call_operand.vmem [shape: f32[8,128], index: 2, kind: input, shape index: {}]
  %s3 = inlined_call_operand.vmem [shape: f32[128,8], index: 3, kind: input, shape index: {}]
  %s4 = inlined_call_operand.vmem [shape: f32[1,8], index: 4, kind: input, shape index: {}]
  %s5 = inlined_call_operand.vmem [shape: f32[1,8], index: 5, kind: input, shape index: {}]
  %s6 = inlined_call_operand.vmem [shape: f32[3,128,256], index: 6, kind: input, shape index: {}]
  %s7 = inlined_call_operand.vmem [shape: f32[16,256], index: 7, kind: input, shape index: {}]
  %s8 = inlined_call_operand.vmem [shape: f32[256,16], index: 8, kind: input, shape index: {}]
  %s9 = inlined_call_operand.vmem [shape: f32[1,16], index: 9, kind: input, shape index: {}]
  %s10 = inlined_call_operand.vmem [shape: f32[1,16], index: 10, kind: input, shape index: {}]
  %s11 = inlined_call_operand.hbm [shape: f32[1024,10], index: 11, kind: input, shape index: {}]
  %s12 = inlined_call_operand.vmem [shape: f32[1,10], index: 12, kind: input, shape index: {}]
  %s13 = inlined_call_operand.hbm [shape: f32[2,10], index: 13, kind: output, shape index: {}]
  %s14 = sld [smem:[#allocation0]]
  $region66: #{_lambda_.1} parent=0
    _
  %s16 = ssub.s32 1, %s14
  %s17 = scalar_select 0, %s16, %s14
  $region1: #{_lambda_.1} parent=0
    #allocation4 [shape = 'u8[524288]{0}', space=vmem, size = 0x80000, scoped, tag = 'input window, operand 11, single buffered']
    #allocation5 [shape = 's32[1]{0}', space=sflag, size = 0x4, scoped, tag = 'scoped memory for _lambda_.1']
    #allocation6 [shape = 's32[1]{0}', space=sflag, size = 0x4, scoped, tag = 'scoped memory for _lambda_.1']
    #allocation7 [shape = 'u8[1024]{0}', space=vmem, size = 0x400, scoped, tag = 'output window, operand 0, single buffered']
    %18 = vsyncpa [#allocation5], 0
    %19 = vsyncpa [#allocation6], 0
    // Predicated region
    $region2: #{_lambda_.1} parent=1 // pred_check
      _
    $region3: #{_lambda_.1} parent=1 // pred_check_branch
      %21 = sbr.rel (0) target = $region5
    $region4: #{_lambda_.1} parent=1 // pred_region
      _
    $region5: #{_lambda_.1} parent=1 // pred_fallthru
      _
    // Predicated region
    $region6: #{_lambda_.1} parent=1 // pred_check
      _
    $region7: #{_lambda_.1} parent=1 // pred_check_branch
      %23 = sbr.rel (0) target = $region9
    $region8: #{_lambda_.1} parent=1 // pred_region
      _
    $region9: #{_lambda_.1} parent=1 // pred_fallthru
      _
    // Predicated region
    $region10: #{_lambda_.1} parent=1 // pred_check
      _
    $region11: #{_lambda_.1} parent=1 // pred_check_branch
      %25 = sbr.rel (0) target = $region13
    $region12: #{_lambda_.1} parent=1 // pred_region
      _
    $region13: #{_lambda_.1} parent=1 // pred_fallthru
      _
    // Predicated region
    $region14: #{_lambda_.1} parent=1 // pred_check
      _
    $region15: #{_lambda_.1} parent=1 // pred_check_branch
      %27 = sbr.rel (0) target = $region17
    $region16: #{_lambda_.1} parent=1 // pred_region
      _
    $region17: #{_lambda_.1} parent=1 // pred_fallthru
      _
    // Predicated region
    $region18: #{_lambda_.1} parent=1 // pred_check
      _
    $region19: #{_lambda_.1} parent=1 // pred_check_branch
      %29 = sbr.rel (0) target = $region21
    $region20: #{_lambda_.1} parent=1 // pred_region
      _
    $region21: #{_lambda_.1} parent=1 // pred_fallthru
      _
    // Predicated region
    $region22: #{_lambda_.1} parent=1 // pred_check
      _
    $region23: #{_lambda_.1} parent=1 // pred_check_branch
      %31 = sbr.rel (0) target = $region25
    $region24: #{_lambda_.1} parent=1 // pred_region
      _
    $region25: #{_lambda_.1} parent=1 // pred_fallthru
      _
    // Predicated region
    $region26: #{_lambda_.1} parent=1 // pred_check
      _
    $region27: #{_lambda_.1} parent=1 // pred_check_branch
      %33 = sbr.rel (0) target = $region29
    $region28: #{_lambda_.1} parent=1 // pred_region
      _
    $region29: #{_lambda_.1} parent=1 // pred_fallthru
      _
    // Predicated region
    $region30: #{_lambda_.1} parent=1 // pred_check
      _
    $region31: #{_lambda_.1} parent=1 // pred_check_branch
      %35 = sbr.rel (0) target = $region33
    $region32: #{_lambda_.1} parent=1 // pred_region
      _
    $region33: #{_lambda_.1} parent=1 // pred_fallthru
      _
    // Predicated region
    $region34: #{_lambda_.1} parent=1 // pred_check
      _
    $region35: #{_lambda_.1} parent=1 // pred_check_branch
      %37 = sbr.rel (0) target = $region37
    $region36: #{_lambda_.1} parent=1 // pred_region
      _
    $region37: #{_lambda_.1} parent=1 // pred_fallthru
      _
    // Predicated region
    $region38: #{_lambda_.1} parent=1 // pred_check
      _
    $region39: #{_lambda_.1} parent=1 // pred_check_branch
      %39 = sbr.rel (0) target = $region41
    $region40: #{_lambda_.1} parent=1 // pred_region
      _
    $region41: #{_lambda_.1} parent=1 // pred_fallthru
      _
    // Predicated region
    $region42: #{_lambda_.1} parent=1 // pred_check
      _
    $region43: #{_lambda_.1} parent=1 // pred_check_branch
      %41 = sbr.rel (0) target = $region45
    $region44: #{_lambda_.1} parent=1 // pred_region
      _
    $region45: #{_lambda_.1} parent=1 // pred_fallthru
      _
    // Predicated region
    $region46: #{_lambda_.1} parent=1 // pred_check
      _
    $region47: #{_lambda_.1} parent=1 // pred_check_branch
      %43 = sbr.rel (0) target = $region49
    $region48: #{_lambda_.1} parent=1 // pred_region
      %45 = vsyncadd [#allocation5], 0
      %s46 = sshll.u32 %s11, 4
      %s47 = int_to_ptr.hbm [resolvable:$true] %s46
      %s48 = sshll.u32 [#allocation4], 4
      %s49 = int_to_ptr.vmem [resolvable:$true] %s48
      %54 = dma.hbm_to_vmem [thread:$0]  %s47, 16384, %s49, [#allocation5], 128, 128, 8
    $region49: #{_lambda_.1} parent=1 // pred_fallthru
      _
    // Predicated region
    $region50: #{_lambda_.1} parent=1 // pred_check
      _
    $region51: #{_lambda_.1} parent=1 // pred_check_branch
      %56 = sbr.rel (0) target = $region53
    $region52: #{_lambda_.1} parent=1 // pred_region
      _
    $region53: #{_lambda_.1} parent=1 // pred_fallthru
      _
    // Predicated region
    $region54: #{_lambda_.1} parent=1 // pred_check
      _
    $region55: #{_lambda_.1} parent=1 // pred_check_branch
      %58 = sbr.rel (0) target = $region57
    $region56: #{_lambda_.1} parent=1 // pred_region
      %60 = dma.done [#allocation5], 16384
    $region57: #{_lambda_.1} parent=1 // pred_fallthru
      _
    %v61 = vld [vmem:[%s0] sm:$0xff]
    %v62 = vld [vmem:[%s0 + $0x8] sm:$0xff]
    %v63 = vld [vmem:[%s0 + $0x10] sm:$0xff]
    %v64 = vld [vmem:[%s0 + $0x18] sm:$0xff]
    %v65 = vld [vmem:[%s1] sm:$0xff]
    %v66 = vld [vmem:[%s1 + $0x8] sm:$0xff]
    %v67 = vld [vmem:[%s1 + $0x10] sm:$0xff]
    %v68 = vld [vmem:[%s1 + $0x18] sm:$0xff]
    %v69 = vld [vmem:[%s1 + $0x20] sm:$0xff]
    %v70 = vld [vmem:[%s1 + $0x28] sm:$0xff]
    %v71 = vld [vmem:[%s1 + $0x30] sm:$0xff]
    %v72 = vld [vmem:[%s1 + $0x38] sm:$0xff]
    %s73 = scalar_lea.vmem %s0, 32
    %v74 = vld [vmem:[%s73] sm:$0xff]
    %v75 = vld [vmem:[%s73 + $0x8] sm:$0xff]
    %v76 = vld [vmem:[%s73 + $0x10] sm:$0xff]
    %v77 = vld [vmem:[%s73 + $0x18] sm:$0xff]
    %s78 = scalar_lea.vmem %s1, 64
    %v79 = vld [vmem:[%s78] sm:$0xff]
    %v80 = vld [vmem:[%s78 + $0x8] sm:$0xff]
    %v81 = vld [vmem:[%s78 + $0x10] sm:$0xff]
    %v82 = vld [vmem:[%s78 + $0x18] sm:$0xff]
    %v83 = vld [vmem:[%s78 + $0x20] sm:$0xff]
    %v84 = vld [vmem:[%s78 + $0x28] sm:$0xff]
    %v85 = vld [vmem:[%s78 + $0x30] sm:$0xff]
    %v86 = vld [vmem:[%s78 + $0x38] sm:$0xff]
    %vm87 = vcmask 523264
    %v89 = vsel %vm87, %v74, 0
    %v92 = vsel %vm87, %v75, 0
    %v95 = vsel %vm87, %v76, 0
    %v98 = vsel %vm87, %v77, 0
    %100 = vmatpush.msra.mxu0 0.0
    %101 = vmatpush.msra.mxu0 0.0
    %102 = vmatpush.msra.mxu0 0.0
    %103 = vmatpush.msra.mxu0 0.0
    %104 = vmatpush.msra.mxu0 0.0
    %105 = vmatpush.msra.mxu0 0.0
    %106 = vmatpush.msra.mxu0 0.0
    %107 = vmatpush.msra.mxu0 0.0
    %108 = vmatpush.msra.mxu0 %v86
    %109 = vmatpush.msra.mxu0 %v85
    %110 = vmatpush.msra.mxu0 %v84
    %111 = vmatpush.msra.mxu0 %v83
    %112 = vmatpush.msra.mxu0 %v82
    %113 = vmatpush.msra.mxu0 %v81
    %114 = vmatpush.msra.mxu0 %v80
    %115 = vmatpush.msra.mxu0 %v79
    %116 = vmatmul.f32.gmra.mxu0 %v89
    %v117 = vpop.f32.mrf.mxu0
    %v118 = vadd.f32 0.0, %v117
    %119 = vmatmul.f32.gmra.mxu0 %v92
    %v120 = vpop.f32.mrf.mxu0
    %v121 = vadd.f32 0.0, %v120
    %122 = vmatmul.f32.gmra.mxu0 %v95
    %v123 = vpop.f32.mrf.mxu0
    %v124 = vadd.f32 0.0, %v123
    %125 = vmatmul.f32.gmra.mxu0 %v98
    %v126 = vpop.f32.mrf.mxu0
    %v127 = vadd.f32 0.0, %v126
    %128 = vdwg.mxu0
    %v130 = vsel %vm87, %v61, 0
    %v133 = vsel %vm87, %v62, 0
    %v136 = vsel %vm87, %v63, 0
    %v139 = vsel %vm87, %v64, 0
    %141 = vmatpush.msra.mxu0 0.0
    %142 = vmatpush.msra.mxu0 0.0
    %143 = vmatpush.msra.mxu0 0.0
    %144 = vmatpush.msra.mxu0 0.0
    %145 = vmatpush.msra.mxu0 0.0
    %146 = vmatpush.msra.mxu0 0.0
    %147 = vmatpush.msra.mxu0 0.0
    %148 = vmatpush.msra.mxu0 0.0
    %149 = vmatpush.msra.mxu0 %v72
    %150 = vmatpush.msra.mxu0 %v71
    %151 = vmatpush.msra.mxu0 %v70
    %152 = vmatpush.msra.mxu0 %v69
    %153 = vmatpush.msra.mxu0 %v68
    %154 = vmatpush.msra.mxu0 %v67
    %155 = vmatpush.msra.mxu0 %v66
    %156 = vmatpush.msra.mxu0 %v65
    %157 = vmatmul.f32.gmra.mxu0 %v130
    %v158 = vpop.f32.mrf.mxu0
    %v159 = vadd.f32 %v118, %v158
    %160 = vmatmul.f32.gmra.mxu0 %v133
    %v161 = vpop.f32.mrf.mxu0
    %v162 = vadd.f32 %v121, %v161
    %163 = vmatmul.f32.gmra.mxu0 %v136
    %v164 = vpop.f32.mrf.mxu0
    %v165 = vadd.f32 %v124, %v164
    %166 = vmatmul.f32.gmra.mxu0 %v139
    %v167 = vpop.f32.mrf.mxu0
    %v168 = vadd.f32 %v127, %v167
    %169 = vdwg.mxu0
    %s170 = scalar_lea.vmem %s0, 64
    %v171 = vld [vmem:[%s170] sm:$0xff]
    %v172 = vld [vmem:[%s170 + $0x8] sm:$0xff]
    %v173 = vld [vmem:[%s170 + $0x10] sm:$0xff]
    %v174 = vld [vmem:[%s170 + $0x18] sm:$0xff]
    %s175 = scalar_lea.vmem %s1, 128
    %v176 = vld [vmem:[%s175] sm:$0xff]
    %v177 = vld [vmem:[%s175 + $0x8] sm:$0xff]
    %v178 = vld [vmem:[%s175 + $0x10] sm:$0xff]
    %v179 = vld [vmem:[%s175 + $0x18] sm:$0xff]
    %v180 = vld [vmem:[%s175 + $0x20] sm:$0xff]
    %v181 = vld [vmem:[%s175 + $0x28] sm:$0xff]
    %v182 = vld [vmem:[%s175 + $0x30] sm:$0xff]
    %v183 = vld [vmem:[%s175 + $0x38] sm:$0xff]
    %v185 = vsel %vm87, %v171, 0
    %v188 = vsel %vm87, %v172, 0
    %v191 = vsel %vm87, %v173, 0
    %v194 = vsel %vm87, %v174, 0
    %196 = vmatpush.msra.mxu0 0.0
    %197 = vmatpush.msra.mxu0 0.0
    %198 = vmatpush.msra.mxu0 0.0
    %199 = vmatpush.msra.mxu0 0.0
    %200 = vmatpush.msra.mxu0 0.0
    %201 = vmatpush.msra.mxu0 0.0
    %202 = vmatpush.msra.mxu0 0.0
    %203 = vmatpush.msra.mxu0 0.0
    %204 = vmatpush.msra.mxu0 %v183
    %205 = vmatpush.msra.mxu0 %v182
    %206 = vmatpush.msra.mxu0 %v181
    %207 = vmatpush.msra.mxu0 %v180
    %208 = vmatpush.msra.mxu0 %v179
    %209 = vmatpush.msra.mxu0 %v178
    %210 = vmatpush.msra.mxu0 %v177
    %211 = vmatpush.msra.mxu0 %v176
    %212 = vmatmul.f32.gmra.mxu0 %v185
    %v213 = vpop.f32.mrf.mxu0
    %v214 = vadd.f32 0.0, %v213
    %215 = vmatmul.f32.gmra.mxu0 %v188
    %v216 = vpop.f32.mrf.mxu0
    %v217 = vadd.f32 0.0, %v216
    %218 = vmatmul.f32.gmra.mxu0 %v191
    %v219 = vpop.f32.mrf.mxu0
    %v220 = vadd.f32 0.0, %v219
    %221 = vmatmul.f32.gmra.mxu0 %v194
    %v222 = vpop.f32.mrf.mxu0
    %v223 = vadd.f32 0.0, %v222
    %224 = vdwg.mxu0
    %v225 = vadd.f32 %v159, %v214
    %v226 = vadd.f32 %v162, %v217
    %v227 = vadd.f32 %v165, %v220
    %v228 = vadd.f32 %v168, %v223
    %v229 = vadd.f32 %v225, %v226
    %v230 = vadd.f32 %v229, %v227
    %v231 = vadd.f32 %v230, %v228
    %v232 = vrot.slane %v231, 4
    %v233 = vadd.f32 %v231, %v232
    %v234 = vrot.slane %v233, 2
    %v235 = vadd.f32 %v233, %v234
    %v236 = vrot.slane %v235, 1
    %v237 = vadd.f32 %v235, %v236
    %v238 = vmul.f32 %v225, %v225
    %v239 = vmul.f32 %v226, %v226
    %v240 = vmul.f32 %v227, %v227
    %v241 = vmul.f32 %v228, %v228
    %v242 = vadd.f32 %v238, %v239
    %v243 = vadd.f32 %v242, %v240
    %v244 = vadd.f32 %v243, %v241
    %v245 = vrot.slane %v244, 4
    %v246 = vadd.f32 %v244, %v245
    %v247 = vrot.slane %v246, 2
    %v248 = vadd.f32 %v246, %v247
    %v249 = vrot.slane %v248, 1
    %v250 = vadd.f32 %v248, %v249
    %vm251 = vcmask 1040384
    %v252 = vsel %vm251, %v237, %v250
    %v253 = vld [vmem:[%s3] sm:$0xff]
    %v254 = vld [vmem:[%s3 + $0x8] sm:$0xff]
    %v255 = vld [vmem:[%s3 + $0x10] sm:$0xff]
    %v256 = vld [vmem:[%s3 + $0x18] sm:$0xff]
    %v257 = vld [vmem:[%s3 + $0x20] sm:$0xff]
    %v258 = vld [vmem:[%s3 + $0x28] sm:$0xff]
    %v259 = vld [vmem:[%s3 + $0x30] sm:$0xff]
    %v260 = vld [vmem:[%s3 + $0x38] sm:$0xff]
    %v261 = vld [vmem:[%s3 + $0x40] sm:$0xff]
    %v262 = vld [vmem:[%s3 + $0x48] sm:$0xff]
    %v263 = vld [vmem:[%s3 + $0x50] sm:$0xff]
    %v264 = vld [vmem:[%s3 + $0x58] sm:$0xff]
    %v265 = vld [vmem:[%s3 + $0x60] sm:$0xff]
    %v266 = vld [vmem:[%s3 + $0x68] sm:$0xff]
    %v267 = vld [vmem:[%s3 + $0x70] sm:$0xff]
    %v268 = vld [vmem:[%s3 + $0x78] sm:$0xff]
    %269 = vmatpush.msra.mxu0 %v268
    %270 = vmatpush.msra.mxu0 %v267
    %271 = vmatpush.msra.mxu0 %v266
    %272 = vmatpush.msra.mxu0 %v265
    %273 = vmatpush.msra.mxu0 %v264
    %274 = vmatpush.msra.mxu0 %v263
    %275 = vmatpush.msra.mxu0 %v262
    %276 = vmatpush.msra.mxu0 %v261
    %277 = vmatpush.msra.mxu0 %v260
    %278 = vmatpush.msra.mxu0 %v259
    %279 = vmatpush.msra.mxu0 %v258
    %280 = vmatpush.msra.mxu0 %v257
    %281 = vmatpush.msra.mxu0 %v256
    %282 = vmatpush.msra.mxu0 %v255
    %283 = vmatpush.msra.mxu0 %v254
    %284 = vmatpush.msra.mxu0 %v253
    %285 = vmatmul.f32.gmra.mxu0 %v252
    %v286 = vpop.f32.mrf.mxu0
    %v287 = vadd.f32 0.0, %v286
    %288 = vdwg.mxu0
    %v289 = vmul.f32 %v287, 0.001953125
    %v290 = vmul.f32 %v289, %v289
    %v292 = vrot.slane %v290, 7
    %v294 = vsub.f32 %v289, %v292
    %v295 = vadd.f32 %v294, 1e-05
    %v296 = vrsqrt.pop %v295
    %v297 = vmul.f32 %v296, %v295
    %v298 = vmul.f32 %v297, %v296
    %v299 = vmul.f32 0.5, %v298
    %v300 = vsub.f32 1.5, %v299
    %v301 = vmul.f32 %v296, %v300
    %vm302 = vweird.f32 %v295
    %vm303 = vweird.f32 %v296
    %vm304 = vmor %vm302, %vm303
    %v305 = vsel %vm304, %v296, %v301
    %v306 = vld [vmem:[%s4] sm:$0x1]
    %308 = vst [vmem:[#allocation1] sm:$0xff] %v305
    %s309 = scalar_lea.vmem [#allocation1], 1
    %v310 = vld [vmem:[%s309] ss:$9 sm:$0xff]
    %v312 = vmul.f32 %v306, %v310
    %v313 = vld [vmem:[%s5] sm:$0x1]
    %v314 = vmul.f32 %v289, %v312
    %v315 = vsub.f32 %v313, %v314
    %v317 = vperm.slane %v315, 0
    %v319 = vsel %vm251, %v312, %v317
    %v320 = vld [vmem:[%s2] sm:$0xff]
    %vm321 = vcmask 64512
    %v323 = vsel %vm321, %v319, 0
    %325 = vmatpush.msra.mxu0 0.0
    %326 = vmatpush.msra.mxu0 0.0
    %327 = vmatpush.msra.mxu0 0.0
    %328 = vmatpush.msra.mxu0 0.0
    %329 = vmatpush.msra.mxu0 0.0
    %330 = vmatpush.msra.mxu0 0.0
    %331 = vmatpush.msra.mxu0 0.0
    %332 = vmatpush.msra.mxu0 0.0
    %333 = vmatpush.msra.mxu0 0.0
    %334 = vmatpush.msra.mxu0 0.0
    %335 = vmatpush.msra.mxu0 0.0
    %336 = vmatpush.msra.mxu0 0.0
    %337 = vmatpush.msra.mxu0 0.0
    %338 = vmatpush.msra.mxu0 0.0
    %339 = vmatpush.msra.mxu0 0.0
    %340 = vmatpush.msra.mxu0 %v320
    %341 = vmatmul.f32.gmra.mxu0 %v323
    %v342 = vpop.f32.mrf.mxu0
    %v343 = vadd.f32 0.0, %v342
    %344 = vdwg.mxu0
    %v345 = vperm.slane %v343, 0
    %v346 = vmul.f32 %v225, %v345
    %v347 = vmul.f32 %v226, %v345
    %v348 = vmul.f32 %v227, %v345
    %v349 = vmul.f32 %v228, %v345
    %v350 = vperm.slane %v343, 1
    %v351 = vadd.f32 %v346, %v350
    %v352 = vadd.f32 %v347, %v350
    %v353 = vadd.f32 %v348, %v350
    %v354 = vadd.f32 %v349, %v350
    %v355 = vmax.f32 %v351, 0.0
    %v356 = vmax.f32 %v352, 0.0
    %v357 = vmax.f32 %v353, 0.0
    %v358 = vmax.f32 %v354, 0.0
    %359 = vst [vmem:[#allocation2] sm:$0x1] 0.0
    %360 = vst [vmem:[#allocation2 + $0x18] sm:$0x1] 0.0
    %361 = vst [vmem:[#allocation2 + $0x11] sm:$0x1] 0.0
    %362 = vst [vmem:[#allocation2 + $0x29] sm:$0x1] 0.0
    %363 = vst [vmem:[#allocation2 + $0x1] sm:$0xff] %v355
    %364 = vst [vmem:[#allocation2 + $0x9] sm:$0xff] %v356
    %365 = vst [vmem:[#allocation2 + $0x19] sm:$0xff] %v357
    %366 = vst [vmem:[#allocation2 + $0x21] sm:$0xff] %v358
    %v367 = vld [vmem:[#allocation2] sm:$0xff]
    %v368 = vld [vmem:[#allocation2 + $0x8] sm:$0xff]
    %v369 = vld [vmem:[#allocation2 + $0x18] sm:$0xff]
    %v370 = vld [vmem:[#allocation2 + $0x20] sm:$0xff]
    %v371 = vld [vmem:[%s6] sm:$0xff]
    %v372 = vld [vmem:[%s6 + $0x8] sm:$0xff]
    %v373 = vld [vmem:[%s6 + $0x10] sm:$0xff]
    %v374 = vld [vmem:[%s6 + $0x18] sm:$0xff]
    %v375 = vld [vmem:[%s6 + $0x20] sm:$0xff]
    %v376 = vld [vmem:[%s6 + $0x28] sm:$0xff]
    %v377 = vld [vmem:[%s6 + $0x30] sm:$0xff]
    %v378 = vld [vmem:[%s6 + $0x38] sm:$0xff]
    %v379 = vld [vmem:[%s6 + $0x40] sm:$0xff]
    %v380 = vld [vmem:[%s6 + $0x48] sm:$0xff]
    %v381 = vld [vmem:[%s6 + $0x50] sm:$0xff]
    %v382 = vld [vmem:[%s6 + $0x58] sm:$0xff]
    %v383 = vld [vmem:[%s6 + $0x60] sm:$0xff]
    %v384 = vld [vmem:[%s6 + $0x68] sm:$0xff]
    %v385 = vld [vmem:[%s6 + $0x70] sm:$0xff]
    %v386 = vld [vmem:[%s6 + $0x78] sm:$0xff]
    %v387 = vld [vmem:[%s6 + $0x80] sm:$0xff]
    %v388 = vld [vmem:[%s6 + $0x88] sm:$0xff]
    %v389 = vld [vmem:[%s6 + $0x90] sm:$0xff]
    %v390 = vld [vmem:[%s6 + $0x98] sm:$0xff]
    %v391 = vld [vmem:[%s6 + $0xa0] sm:$0xff]
    %v392 = vld [vmem:[%s6 + $0xa8] sm:$0xff]
    %v393 = vld [vmem:[%s6 + $0xb0] sm:$0xff]
    %v394 = vld [vmem:[%s6 + $0xb8] sm:$0xff]
    %v395 = vld [vmem:[%s6 + $0xc0] sm:$0xff]
    %v396 = vld [vmem:[%s6 + $0xc8] sm:$0xff]
    %v397 = vld [vmem:[%s6 + $0xd0] sm:$0xff]
    %v398 = vld [vmem:[%s6 + $0xd8] sm:$0xff]
    %v399 = vld [vmem:[%s6 + $0xe0] sm:$0xff]
    %v400 = vld [vmem:[%s6 + $0xe8] sm:$0xff]
    %v401 = vld [vmem:[%s6 + $0xf0] sm:$0xff]
    %v402 = vld [vmem:[%s6 + $0xf8] sm:$0xff]
    %v403 = vld [vmem:[#allocation2 + $0x1] sm:$0xff]
    %v404 = vld [vmem:[#allocation2 + $0x9] sm:$0xff]
    %v405 = vld [vmem:[#allocation2 + $0x19] sm:$0xff]
    %v406 = vld [vmem:[#allocation2 + $0x21] sm:$0xff]
    %s407 = scalar_lea.vmem %s6, 256
    %v408 = vld [vmem:[%s407] sm:$0xff]
    %v409 = vld [vmem:[%s407 + $0x8] sm:$0xff]
    %v410 = vld [vmem:[%s407 + $0x10] sm:$0xff]
    %v411 = vld [vmem:[%s407 + $0x18] sm:$0xff]
    %v412 = vld [vmem:[%s407 + $0x20] sm:$0xff]
    %v413 = vld [vmem:[%s407 + $0x28] sm:$0xff]
    %v414 = vld [vmem:[%s407 + $0x30] sm:$0xff]
    %v415 = vld [vmem:[%s407 + $0x38] sm:$0xff]
    %v416 = vld [vmem:[%s407 + $0x40] sm:$0xff]
    %v417 = vld [vmem:[%s407 + $0x48] sm:$0xff]
    %v418 = vld [vmem:[%s407 + $0x50] sm:$0xff]
    %v419 = vld [vmem:[%s407 + $0x58] sm:$0xff]
    %v420 = vld [vmem:[%s407 + $0x60] sm:$0xff]
    %v421 = vld [vmem:[%s407 + $0x68] sm:$0xff]
    %v422 = vld [vmem:[%s407 + $0x70] sm:$0xff]
    %v423 = vld [vmem:[%s407 + $0x78] sm:$0xff]
    %v424 = vld [vmem:[%s407 + $0x80] sm:$0xff]
    %v425 = vld [vmem:[%s407 + $0x88] sm:$0xff]
    %v426 = vld [vmem:[%s407 + $0x90] sm:$0xff]
    %v427 = vld [vmem:[%s407 + $0x98] sm:$0xff]
    %v428 = vld [vmem:[%s407 + $0xa0] sm:$0xff]
    %v429 = vld [vmem:[%s407 + $0xa8] sm:$0xff]
    %v430 = vld [vmem:[%s407 + $0xb0] sm:$0xff]
    %v431 = vld [vmem:[%s407 + $0xb8] sm:$0xff]
    %v432 = vld [vmem:[%s407 + $0xc0] sm:$0xff]
    %v433 = vld [vmem:[%s407 + $0xc8] sm:$0xff]
    %v434 = vld [vmem:[%s407 + $0xd0] sm:$0xff]
    %v435 = vld [vmem:[%s407 + $0xd8] sm:$0xff]
    %v436 = vld [vmem:[%s407 + $0xe0] sm:$0xff]
    %v437 = vld [vmem:[%s407 + $0xe8] sm:$0xff]
    %v438 = vld [vmem:[%s407 + $0xf0] sm:$0xff]
    %v439 = vld [vmem:[%s407 + $0xf8] sm:$0xff]
    %440 = vmatpush.msra.mxu0 %v438
    %441 = vmatpush.msra.mxu0 %v436
    %442 = vmatpush.msra.mxu0 %v434
    %443 = vmatpush.msra.mxu0 %v432
    %444 = vmatpush.msra.mxu0 %v430
    %445 = vmatpush.msra.mxu0 %v428
    %446 = vmatpush.msra.mxu0 %v426
    %447 = vmatpush.msra.mxu0 %v424
    %448 = vmatpush.msra.mxu0 %v422
    %449 = vmatpush.msra.mxu0 %v420
    %450 = vmatpush.msra.mxu0 %v418
    %451 = vmatpush.msra.mxu0 %v416
    %452 = vmatpush.msra.mxu0 %v414
    %453 = vmatpush.msra.mxu0 %v412
    %454 = vmatpush.msra.mxu0 %v410
    %455 = vmatpush.msra.mxu0 %v408
    %456 = vmatmul.f32.gmra.mxu0 %v403
    %v457 = vpop.f32.mrf.mxu0
    %v458 = vadd.f32 0.0, %v457
    %459 = vmatmul.f32.gmra.mxu0 %v404
    %v460 = vpop.f32.mrf.mxu0
    %v461 = vadd.f32 0.0, %v460
    %462 = vmatmul.f32.gmra.mxu0 %v405
    %v463 = vpop.f32.mrf.mxu0
    %v464 = vadd.f32 0.0, %v463
    %465 = vmatmul.f32.gmra.mxu0 %v406
    %v466 = vpop.f32.mrf.mxu0
    %v467 = vadd.f32 0.0, %v466
    %468 = vdwg.mxu0
    %469 = vmatpush.msra.mxu0 %v439
    %470 = vmatpush.msra.mxu0 %v437
    %471 = vmatpush.msra.mxu0 %v435
    %472 = vmatpush.msra.mxu0 %v433
    %473 = vmatpush.msra.mxu0 %v431
    %474 = vmatpush.msra.mxu0 %v429
    %475 = vmatpush.msra.mxu0 %v427
    %476 = vmatpush.msra.mxu0 %v425
    %477 = vmatpush.msra.mxu0 %v423
    %478 = vmatpush.msra.mxu0 %v421
    %479 = vmatpush.msra.mxu0 %v419
    %480 = vmatpush.msra.mxu0 %v417
    %481 = vmatpush.msra.mxu0 %v415
    %482 = vmatpush.msra.mxu0 %v413
    %483 = vmatpush.msra.mxu0 %v411
    %484 = vmatpush.msra.mxu0 %v409
    %485 = vmatmul.f32.gmra.mxu0 %v403
    %v486 = vpop.f32.mrf.mxu0
    %v487 = vadd.f32 0.0, %v486
    %488 = vmatmul.f32.gmra.mxu0 %v404
    %v489 = vpop.f32.mrf.mxu0
    %v490 = vadd.f32 0.0, %v489
    %491 = vmatmul.f32.gmra.mxu0 %v405
    %v492 = vpop.f32.mrf.mxu0
    %v493 = vadd.f32 0.0, %v492
    %494 = vmatmul.f32.gmra.mxu0 %v406
    %v495 = vpop.f32.mrf.mxu0
    %v496 = vadd.f32 0.0, %v495
    %497 = vdwg.mxu0
    %498 = vmatpush.msra.mxu0 %v401
    %499 = vmatpush.msra.mxu0 %v399
    %500 = vmatpush.msra.mxu0 %v397
    %501 = vmatpush.msra.mxu0 %v395
    %502 = vmatpush.msra.mxu0 %v393
    %503 = vmatpush.msra.mxu0 %v391
    %504 = vmatpush.msra.mxu0 %v389
    %505 = vmatpush.msra.mxu0 %v387
    %506 = vmatpush.msra.mxu0 %v385
    %507 = vmatpush.msra.mxu0 %v383
    %508 = vmatpush.msra.mxu0 %v381
    %509 = vmatpush.msra.mxu0 %v379
    %510 = vmatpush.msra.mxu0 %v377
    %511 = vmatpush.msra.mxu0 %v375
    %512 = vmatpush.msra.mxu0 %v373
    %513 = vmatpush.msra.mxu0 %v371
    %514 = vmatmul.f32.gmra.mxu0 %v367
    %v515 = vpop.f32.mrf.mxu0
    %v516 = vadd.f32 %v458, %v515
    %517 = vmatmul.f32.gmra.mxu0 %v368
    %v518 = vpop.f32.mrf.mxu0
    %v519 = vadd.f32 %v461, %v518
    %520 = vmatmul.f32.gmra.mxu0 %v369
    %v521 = vpop.f32.mrf.mxu0
    %v522 = vadd.f32 %v464, %v521
    %523 = vmatmul.f32.gmra.mxu0 %v370
    %v524 = vpop.f32.mrf.mxu0
    %v525 = vadd.f32 %v467, %v524
    %526 = vdwg.mxu0
    %527 = vmatpush.msra.mxu0 %v402
    %528 = vmatpush.msra.mxu0 %v400
    %529 = vmatpush.msra.mxu0 %v398
    %530 = vmatpush.msra.mxu0 %v396
    %531 = vmatpush.msra.mxu0 %v394
    %532 = vmatpush.msra.mxu0 %v392
    %533 = vmatpush.msra.mxu0 %v390
    %534 = vmatpush.msra.mxu0 %v388
    %535 = vmatpush.msra.mxu0 %v386
    %536 = vmatpush.msra.mxu0 %v384
    %537 = vmatpush.msra.mxu0 %v382
    %538 = vmatpush.msra.mxu0 %v380
    %539 = vmatpush.msra.mxu0 %v378
    %540 = vmatpush.msra.mxu0 %v376
    %541 = vmatpush.msra.mxu0 %v374
    %542 = vmatpush.msra.mxu0 %v372
    %543 = vmatmul.f32.gmra.mxu0 %v367
    %v544 = vpop.f32.mrf.mxu0
    %v545 = vadd.f32 %v487, %v544
    %546 = vmatmul.f32.gmra.mxu0 %v368
    %v547 = vpop.f32.mrf.mxu0
    %v548 = vadd.f32 %v490, %v547
    %549 = vmatmul.f32.gmra.mxu0 %v369
    %v550 = vpop.f32.mrf.mxu0
    %v551 = vadd.f32 %v493, %v550
    %552 = vmatmul.f32.gmra.mxu0 %v370
    %v553 = vpop.f32.mrf.mxu0
    %v554 = vadd.f32 %v496, %v553
    %555 = vdwg.mxu0
    %v556 = vld [vmem:[#allocation2 + $0x2] sm:$0xff]
    %v557 = vld [vmem:[#allocation2 + $0xa] sm:$0xff]
    %v558 = vld [vmem:[#allocation2 + $0x1a] sm:$0xff]
    %v559 = vld [vmem:[#allocation2 + $0x22] sm:$0xff]
    %s560 = scalar_lea.vmem %s6, 512
    %v561 = vld [vmem:[%s560] sm:$0xff]
    %v562 = vld [vmem:[%s560 + $0x8] sm:$0xff]
    %v563 = vld [vmem:[%s560 + $0x10] sm:$0xff]
    %v564 = vld [vmem:[%s560 + $0x18] sm:$0xff]
    %v565 = vld [vmem:[%s560 + $0x20] sm:$0xff]
    %v566 = vld [vmem:[%s560 + $0x28] sm:$0xff]
    %v567 = vld [vmem:[%s560 + $0x30] sm:$0xff]
    %v568 = vld [vmem:[%s560 + $0x38] sm:$0xff]
    %v569 = vld [vmem:[%s560 + $0x40] sm:$0xff]
    %v570 = vld [vmem:[%s560 + $0x48] sm:$0xff]
    %v571 = vld [vmem:[%s560 + $0x50] sm:$0xff]
    %v572 = vld [vmem:[%s560 + $0x58] sm:$0xff]
    %v573 = vld [vmem:[%s560 + $0x60] sm:$0xff]
    %v574 = vld [vmem:[%s560 + $0x68] sm:$0xff]
    %v575 = vld [vmem:[%s560 + $0x70] sm:$0xff]
    %v576 = vld [vmem:[%s560 + $0x78] sm:$0xff]
    %v577 = vld [vmem:[%s560 + $0x80] sm:$0xff]
    %v578 = vld [vmem:[%s560 + $0x88] sm:$0xff]
    %v579 = vld [vmem:[%s560 + $0x90] sm:$0xff]
    %v580 = vld [vmem:[%s560 + $0x98] sm:$0xff]
    %v581 = vld [vmem:[%s560 + $0xa0] sm:$0xff]
    %v582 = vld [vmem:[%s560 + $0xa8] sm:$0xff]
    %v583 = vld [vmem:[%s560 + $0xb0] sm:$0xff]
    %v584 = vld [vmem:[%s560 + $0xb8] sm:$0xff]
    %v585 = vld [vmem:[%s560 + $0xc0] sm:$0xff]
    %v586 = vld [vmem:[%s560 + $0xc8] sm:$0xff]
    %v587 = vld [vmem:[%s560 + $0xd0] sm:$0xff]
    %v588 = vld [vmem:[%s560 + $0xd8] sm:$0xff]
    %v589 = vld [vmem:[%s560 + $0xe0] sm:$0xff]
    %v590 = vld [vmem:[%s560 + $0xe8] sm:$0xff]
    %v591 = vld [vmem:[%s560 + $0xf0] sm:$0xff]
    %v592 = vld [vmem:[%s560 + $0xf8] sm:$0xff]
    %593 = vmatpush.msra.mxu0 %v591
    %594 = vmatpush.msra.mxu0 %v589
    %595 = vmatpush.msra.mxu0 %v587
    %596 = vmatpush.msra.mxu0 %v585
    %597 = vmatpush.msra.mxu0 %v583
    %598 = vmatpush.msra.mxu0 %v581
    %599 = vmatpush.msra.mxu0 %v579
    %600 = vmatpush.msra.mxu0 %v577
    %601 = vmatpush.msra.mxu0 %v575
    %602 = vmatpush.msra.mxu0 %v573
    %603 = vmatpush.msra.mxu0 %v571
    %604 = vmatpush.msra.mxu0 %v569
    %605 = vmatpush.msra.mxu0 %v567
    %606 = vmatpush.msra.mxu0 %v565
    %607 = vmatpush.msra.mxu0 %v563
    %608 = vmatpush.msra.mxu0 %v561
    %609 = vmatmul.f32.gmra.mxu0 %v556
    %v610 = vpop.f32.mrf.mxu0
    %v611 = vadd.f32 0.0, %v610
    %612 = vmatmul.f32.gmra.mxu0 %v557
    %v613 = vpop.f32.mrf.mxu0
    %v614 = vadd.f32 0.0, %v613
    %615 = vmatmul.f32.gmra.mxu0 %v558
    %v616 = vpop.f32.mrf.mxu0
    %v617 = vadd.f32 0.0, %v616
    %618 = vmatmul.f32.gmra.mxu0 %v559
    %v619 = vpop.f32.mrf.mxu0
    %v620 = vadd.f32 0.0, %v619
    %621 = vdwg.mxu0
    %622 = vmatpush.msra.mxu0 %v592
    %623 = vmatpush.msra.mxu0 %v590
    %624 = vmatpush.msra.mxu0 %v588
    %625 = vmatpush.msra.mxu0 %v586
    %626 = vmatpush.msra.mxu0 %v584
    %627 = vmatpush.msra.mxu0 %v582
    %628 = vmatpush.msra.mxu0 %v580
    %629 = vmatpush.msra.mxu0 %v578
    %630 = vmatpush.msra.mxu0 %v576
    %631 = vmatpush.msra.mxu0 %v574
    %632 = vmatpush.msra.mxu0 %v572
    %633 = vmatpush.msra.mxu0 %v570
    %634 = vmatpush.msra.mxu0 %v568
    %635 = vmatpush.msra.mxu0 %v566
    %636 = vmatpush.msra.mxu0 %v564
    %637 = vmatpush.msra.mxu0 %v562
    %638 = vmatmul.f32.gmra.mxu0 %v556
    %v639 = vpop.f32.mrf.mxu0
    %v640 = vadd.f32 0.0, %v639
    %641 = vmatmul.f32.gmra.mxu0 %v557
    %v642 = vpop.f32.mrf.mxu0
    %v643 = vadd.f32 0.0, %v642
    %644 = vmatmul.f32.gmra.mxu0 %v558
    %v645 = vpop.f32.mrf.mxu0
    %v646 = vadd.f32 0.0, %v645
    %647 = vmatmul.f32.gmra.mxu0 %v559
    %v648 = vpop.f32.mrf.mxu0
    %v649 = vadd.f32 0.0, %v648
    %650 = vdwg.mxu0
    %v651 = vadd.f32 %v516, %v611
    %v652 = vadd.f32 %v545, %v640
    %v653 = vadd.f32 %v519, %v614
    %v654 = vadd.f32 %v548, %v643
    %v655 = vadd.f32 %v522, %v617
    %v656 = vadd.f32 %v551, %v646
    %v657 = vadd.f32 %v525, %v620
    %v658 = vadd.f32 %v554, %v649
    %v659 = vadd.f32 %v651, %v653
    %v660 = vadd.f32 %v659, %v655
    %v661 = vadd.f32 %v660, %v657
    %v662 = vrot.slane %v661, 4
    %v663 = vadd.f32 %v661, %v662
    %v664 = vrot.slane %v663, 2
    %v665 = vadd.f32 %v663, %v664
    %v666 = vrot.slane %v665, 1
    %v667 = vadd.f32 %v665, %v666
    %v668 = vadd.f32 %v652, %v654
    %v669 = vadd.f32 %v668, %v656
    %v670 = vadd.f32 %v669, %v658
    %v671 = vrot.slane %v670, 4
    %v672 = vadd.f32 %v670, %v671
    %v673 = vrot.slane %v672, 2
    %v674 = vadd.f32 %v672, %v673
    %v675 = vrot.slane %v674, 1
    %v676 = vadd.f32 %v674, %v675
    %v677 = vmul.f32 %v651, %v651
    %v678 = vmul.f32 %v652, %v652
    %v679 = vmul.f32 %v653, %v653
    %v680 = vmul.f32 %v654, %v654
    %v681 = vmul.f32 %v655, %v655
    %v682 = vmul.f32 %v656, %v656
    %v683 = vmul.f32 %v657, %v657
    %v684 = vmul.f32 %v658, %v658
    %v685 = vadd.f32 %v677, %v679
    %v686 = vadd.f32 %v685, %v681
    %v687 = vadd.f32 %v686, %v683
    %v688 = vrot.slane %v687, 4
    %v689 = vadd.f32 %v687, %v688
    %v690 = vrot.slane %v689, 2
    %v691 = vadd.f32 %v689, %v690
    %v692 = vrot.slane %v691, 1
    %v693 = vadd.f32 %v691, %v692
    %v694 = vadd.f32 %v678, %v680
    %v695 = vadd.f32 %v694, %v682
    %v696 = vadd.f32 %v695, %v684
    %v697 = vrot.slane %v696, 4
    %v698 = vadd.f32 %v696, %v697
    %v699 = vrot.slane %v698, 2
    %v700 = vadd.f32 %v698, %v699
    %v701 = vrot.slane %v700, 1
    %v702 = vadd.f32 %v700, %v701
    %v703 = vsel %vm251, %v667, %v693
    %v704 = vsel %vm251, %v676, %v702
    %v705 = vld [vmem:[%s8] sm:$0xff]
    %v706 = vld [vmem:[%s8 + $0x8] sm:$0xff]
    %v707 = vld [vmem:[%s8 + $0x10] sm:$0xff]
    %v708 = vld [vmem:[%s8 + $0x18] sm:$0xff]
    %v709 = vld [vmem:[%s8 + $0x20] sm:$0xff]
    %v710 = vld [vmem:[%s8 + $0x28] sm:$0xff]
    %v711 = vld [vmem:[%s8 + $0x30] sm:$0xff]
    %v712 = vld [vmem:[%s8 + $0x38] sm:$0xff]
    %v713 = vld [vmem:[%s8 + $0x40] sm:$0xff]
    %v714 = vld [vmem:[%s8 + $0x48] sm:$0xff]
    %v715 = vld [vmem:[%s8 + $0x50] sm:$0xff]
    %v716 = vld [vmem:[%s8 + $0x58] sm:$0xff]
    %v717 = vld [vmem:[%s8 + $0x60] sm:$0xff]
    %v718 = vld [vmem:[%s8 + $0x68] sm:$0xff]
    %v719 = vld [vmem:[%s8 + $0x70] sm:$0xff]
    %v720 = vld [vmem:[%s8 + $0x78] sm:$0xff]
    %v721 = vld [vmem:[%s8 + $0x80] sm:$0xff]
    %v722 = vld [vmem:[%s8 + $0x88] sm:$0xff]
    %v723 = vld [vmem:[%s8 + $0x90] sm:$0xff]
    %v724 = vld [vmem:[%s8 + $0x98] sm:$0xff]
    %v725 = vld [vmem:[%s8 + $0xa0] sm:$0xff]
    %v726 = vld [vmem:[%s8 + $0xa8] sm:$0xff]
    %v727 = vld [vmem:[%s8 + $0xb0] sm:$0xff]
    %v728 = vld [vmem:[%s8 + $0xb8] sm:$0xff]
    %v729 = vld [vmem:[%s8 + $0xc0] sm:$0xff]
    %v730 = vld [vmem:[%s8 + $0xc8] sm:$0xff]
    %v731 = vld [vmem:[%s8 + $0xd0] sm:$0xff]
    %v732 = vld [vmem:[%s8 + $0xd8] sm:$0xff]
    %v733 = vld [vmem:[%s8 + $0xe0] sm:$0xff]
    %v734 = vld [vmem:[%s8 + $0xe8] sm:$0xff]
    %v735 = vld [vmem:[%s8 + $0xf0] sm:$0xff]
    %v736 = vld [vmem:[%s8 + $0xf8] sm:$0xff]
    %737 = vmatpush.msra.mxu0 %v720
    %738 = vmatpush.msra.mxu0 %v719
    %739 = vmatpush.msra.mxu0 %v718
    %740 = vmatpush.msra.mxu0 %v717
    %741 = vmatpush.msra.mxu0 %v716
    %742 = vmatpush.msra.mxu0 %v715
    %743 = vmatpush.msra.mxu0 %v714
    %744 = vmatpush.msra.mxu0 %v713
    %745 = vmatpush.msra.mxu0 %v712
    %746 = vmatpush.msra.mxu0 %v711
    %747 = vmatpush.msra.mxu0 %v710
    %748 = vmatpush.msra.mxu0 %v709
    %749 = vmatpush.msra.mxu0 %v708
    %750 = vmatpush.msra.mxu0 %v707
    %751 = vmatpush.msra.mxu0 %v706
    %752 = vmatpush.msra.mxu0 %v705
    %753 = vmatmul.f32.gmra.mxu0 %v703
    %v754 = vpop.f32.mrf.mxu0
    %v755 = vadd.f32 0.0, %v754
    %756 = vdwg.mxu0
    %757 = vmatpush.msra.mxu0 %v736
    %758 = vmatpush.msra.mxu0 %v735
    %759 = vmatpush.msra.mxu0 %v734
    %760 = vmatpush.msra.mxu0 %v733
    %761 = vmatpush.msra.mxu0 %v732
    %762 = vmatpush.msra.mxu0 %v731
    %763 = vmatpush.msra.mxu0 %v730
    %764 = vmatpush.msra.mxu0 %v729
    %765 = vmatpush.msra.mxu0 %v728
    %766 = vmatpush.msra.mxu0 %v727
    %767 = vmatpush.msra.mxu0 %v726
    %768 = vmatpush.msra.mxu0 %v725
    %769 = vmatpush.msra.mxu0 %v724
    %770 = vmatpush.msra.mxu0 %v723
    %771 = vmatpush.msra.mxu0 %v722
    %772 = vmatpush.msra.mxu0 %v721
    %773 = vmatmul.f32.gmra.mxu0 %v704
    %v774 = vpop.f32.mrf.mxu0
    %v775 = vadd.f32 %v755, %v774
    %776 = vdwg.mxu0
    %v777 = vmul.f32 %v775, 0.001953125
    %v778 = vmul.f32 %v777, %v777
    %v780 = vrot.slane %v778, 7
    %v782 = vsub.f32 %v777, %v780
    %v783 = vadd.f32 %v782, 1e-05
    %v784 = vrsqrt.pop %v783
    %v785 = vmul.f32 %v784, %v783
    %v786 = vmul.f32 %v785, %v784
    %v787 = vmul.f32 0.5, %v786
    %v788 = vsub.f32 1.5, %v787
    %v789 = vmul.f32 %v784, %v788
    %vm790 = vweird.f32 %v783
    %vm791 = vweird.f32 %v784
    %vm792 = vmor %vm790, %vm791
    %v793 = vsel %vm792, %v784, %v789
    %v794 = vld [vmem:[%s9] sm:$0x1]
    %796 = vst [vmem:[#allocation1] sm:$0xff] %v793
    %s797 = scalar_lea.vmem [#allocation1], 1
    %v798 = vld [vmem:[%s797] ss:$9 sm:$0xff]
    %v800 = vmul.f32 %v794, %v798
    %v801 = vld [vmem:[%s10] sm:$0x1]
    %v802 = vmul.f32 %v777, %v800
    %v803 = vsub.f32 %v801, %v802
    %v805 = vperm.slane %v803, 0
    %v807 = vsel %vm251, %v800, %v805
    %v808 = vld [vmem:[%s7] sm:$0xff]
    %v809 = vld [vmem:[%s7 + $0x8] sm:$0xff]
    %v810 = vld [vmem:[%s7 + $0x10] sm:$0xff]
    %v811 = vld [vmem:[%s7 + $0x18] sm:$0xff]
    %vm812 = vcmask 130048
    %v814 = vsel %vm812, %v807, 0
    %816 = vmatpush.msra.mxu0 0.0
    %817 = vmatpush.msra.mxu0 0.0
    %818 = vmatpush.msra.mxu0 0.0
    %819 = vmatpush.msra.mxu0 0.0
    %820 = vmatpush.msra.mxu0 0.0
    %821 = vmatpush.msra.mxu0 0.0
    %822 = vmatpush.msra.mxu0 0.0
    %823 = vmatpush.msra.mxu0 0.0
    %824 = vmatpush.msra.mxu0 0.0
    %825 = vmatpush.msra.mxu0 0.0
    %826 = vmatpush.msra.mxu0 0.0
    %827 = vmatpush.msra.mxu0 0.0
    %828 = vmatpush.msra.mxu0 0.0
    %829 = vmatpush.msra.mxu0 0.0
    %830 = vmatpush.msra.mxu0 %v810
    %831 = vmatpush.msra.mxu0 %v808
    %832 = vmatmul.f32.gmra.mxu0 %v814
    %v833 = vpop.f32.mrf.mxu0
    %v834 = vadd.f32 0.0, %v833
    %835 = vdwg.mxu0
    %836 = vmatpush.msra.mxu0 0.0
    %837 = vmatpush.msra.mxu0 0.0
    %838 = vmatpush.msra.mxu0 0.0
    %839 = vmatpush.msra.mxu0 0.0
    %840 = vmatpush.msra.mxu0 0.0
    %841 = vmatpush.msra.mxu0 0.0
    %842 = vmatpush.msra.mxu0 0.0
    %843 = vmatpush.msra.mxu0 0.0
    %844 = vmatpush.msra.mxu0 0.0
    %845 = vmatpush.msra.mxu0 0.0
    %846 = vmatpush.msra.mxu0 0.0
    %847 = vmatpush.msra.mxu0 0.0
    %848 = vmatpush.msra.mxu0 0.0
    %849 = vmatpush.msra.mxu0 0.0
    %850 = vmatpush.msra.mxu0 %v811
    %851 = vmatpush.msra.mxu0 %v809
    %852 = vmatmul.f32.gmra.mxu0 %v814
    %v853 = vpop.f32.mrf.mxu0
    %v854 = vadd.f32 0.0, %v853
    %855 = vdwg.mxu0
    %v856 = vperm.slane %v834, 0
    %v857 = vperm.slane %v854, 0
    %v858 = vmul.f32 %v651, %v856
    %v859 = vmul.f32 %v652, %v857
    %v860 = vmul.f32 %v653, %v856
    %v861 = vmul.f32 %v654, %v857
    %v862 = vmul.f32 %v655, %v856
    %v863 = vmul.f32 %v656, %v857
    %v864 = vmul.f32 %v657, %v856
    %v865 = vmul.f32 %v658, %v857
    %v866 = vperm.slane %v834, 1
    %v867 = vperm.slane %v854, 1
    %v868 = vadd.f32 %v858, %v866
    %v869 = vadd.f32 %v859, %v867
    %v870 = vadd.f32 %v860, %v866
    %v871 = vadd.f32 %v861, %v867
    %v872 = vadd.f32 %v862, %v866
    %v873 = vadd.f32 %v863, %v867
    %v874 = vadd.f32 %v864, %v866
    %v875 = vadd.f32 %v865, %v867
    %v876 = vmax.f32 %v868, 0.0
    %v877 = vmax.f32 %v869, 0.0
    %v878 = vmax.f32 %v870, 0.0
    %v879 = vmax.f32 %v871, 0.0
    %v880 = vmax.f32 %v872, 0.0
    %v881 = vmax.f32 %v873, 0.0
    %v882 = vmax.f32 %v874, 0.0
    %v883 = vmax.f32 %v875, 0.0
    %v892 = vrot.slane %v877, 6
    %v893 = vrot.slane %v879, 6
    %v894 = vrot.slane %v881, 6
    %v895 = vrot.slane %v883, 6
    %vm896 = vcmask 1041408
    %v897 = vsel %vm896, %v876, %v892
    %vm898 = vcmask 1043458
    %v899 = vsel %vm898, %v876, %v892
    %v900 = vrot.slane %v899, 2
    %vm901 = vcmask 1045508
    %v902 = vsel %vm901, %v876, %v892
    %v903 = vrot.slane %v902, 4
    %vm904 = vcmask 1045504
    %v905 = vsel %vm904, %v892, %v876
    %v906 = vrot.slane %v905, 6
    %v907 = vsel %vm896, %v878, %v893
    %v908 = vsel %vm898, %v878, %v893
    %v909 = vrot.slane %v908, 2
    %v910 = vsel %vm901, %v878, %v893
    %v911 = vrot.slane %v910, 4
    %v912 = vsel %vm904, %v893, %v878
    %v913 = vrot.slane %v912, 6
    %v914 = vsel %vm896, %v880, %v894
    %v915 = vsel %vm898, %v880, %v894
    %v916 = vrot.slane %v915, 2
    %v917 = vsel %vm901, %v880, %v894
    %v918 = vrot.slane %v917, 4
    %v919 = vsel %vm904, %v894, %v880
    %v920 = vrot.slane %v919, 6
    %v921 = vsel %vm896, %v882, %v895
    %v922 = vsel %vm898, %v882, %v895
    %v923 = vrot.slane %v922, 2
    %v924 = vsel %vm901, %v882, %v895
    %v925 = vrot.slane %v924, 4
    %v926 = vsel %vm904, %v895, %v882
    %v927 = vrot.slane %v926, 6
    %v944 = vrot.slane %v897, 7
    %v945 = vrot.slane %v944, 2
    %v946 = vrot.slane %v900, 7
    %v947 = vrot.slane %v946, 2
    %v948 = vrot.slane %v903, 7
    %v949 = vrot.slane %v948, 2
    %v950 = vrot.slane %v906, 7
    %v951 = vrot.slane %v950, 2
    %v952 = vrot.slane %v907, 7
    %v953 = vrot.slane %v952, 2
    %v954 = vrot.slane %v909, 7
    %v955 = vrot.slane %v954, 2
    %v956 = vrot.slane %v911, 7
    %v957 = vrot.slane %v956, 2
    %v958 = vrot.slane %v913, 7
    %v959 = vrot.slane %v958, 2
    %v960 = vrot.slane %v914, 7
    %v961 = vrot.slane %v960, 2
    %v962 = vrot.slane %v916, 7
    %v963 = vrot.slane %v962, 2
    %v964 = vrot.slane %v918, 7
    %v965 = vrot.slane %v964, 2
    %v966 = vrot.slane %v920, 7
    %v967 = vrot.slane %v966, 2
    %v968 = vrot.slane %v921, 7
    %v969 = vrot.slane %v968, 2
    %v970 = vrot.slane %v923, 7
    %v971 = vrot.slane %v970, 2
    %v972 = vrot.slane %v925, 7
    %v973 = vrot.slane %v972, 2
    %v974 = vrot.slane %v927, 7
    %v975 = vrot.slane %v974, 2
    %v992 = vmax.f32 %v897, %v945
    %v993 = vmax.f32 %v900, %v947
    %v994 = vmax.f32 %v903, %v949
    %v995 = vmax.f32 %v906, %v951
    %v996 = vmax.f32 %v907, %v953
    %v997 = vmax.f32 %v909, %v955
    %v998 = vmax.f32 %v911, %v957
    %v999 = vmax.f32 %v913, %v959
    %v1000 = vmax.f32 %v914, %v961
    %v1001 = vmax.f32 %v916, %v963
    %v1002 = vmax.f32 %v918, %v965
    %v1003 = vmax.f32 %v920, %v967
    %v1004 = vmax.f32 %v921, %v969
    %v1005 = vmax.f32 %v923, %v971
    %v1006 = vmax.f32 %v925, %v973
    %v1007 = vmax.f32 %v927, %v975
    %v1024 = vrot.slane %v992, 2
    %v1025 = vrot.slane %v993, 2
    %v1026 = vrot.slane %v994, 2
    %v1027 = vrot.slane %v995, 2
    %v1028 = vrot.slane %v996, 2
    %v1029 = vrot.slane %v997, 2
    %v1030 = vrot.slane %v998, 2
    %v1031 = vrot.slane %v999, 2
    %v1032 = vrot.slane %v1000, 2
    %v1033 = vrot.slane %v1001, 2
    %v1034 = vrot.slane %v1002, 2
    %v1035 = vrot.slane %v1003, 2
    %v1036 = vrot.slane %v1004, 2
    %v1037 = vrot.slane %v1005, 2
    %v1038 = vrot.slane %v1006, 2
    %v1039 = vrot.slane %v1007, 2
    %v1056 = vmax.f32 %v992, %v1024
    %v1057 = vmax.f32 %v993, %v1025
    %v1058 = vmax.f32 %v994, %v1026
    %v1059 = vmax.f32 %v995, %v1027
    %v1060 = vmax.f32 %v996, %v1028
    %v1061 = vmax.f32 %v997, %v1029
    %v1062 = vmax.f32 %v998, %v1030
    %v1063 = vmax.f32 %v999, %v1031
    %v1064 = vmax.f32 %v1000, %v1032
    %v1065 = vmax.f32 %v1001, %v1033
    %v1066 = vmax.f32 %v1002, %v1034
    %v1067 = vmax.f32 %v1003, %v1035
    %v1068 = vmax.f32 %v1004, %v1036
    %v1069 = vmax.f32 %v1005, %v1037
    %v1070 = vmax.f32 %v1006, %v1038
    %v1071 = vmax.f32 %v1007, %v1039
    %vm1074 = vcmask 1044484
    %v1075 = vsel %vm1074, %v1056, %v1056
    %vm1076 = vcmask 1046534
    %v1077 = vsel %vm1076, %v1056, %v1075
    %v1078 = vrot.slane %v1064, 7
    %vm1079 = vcmask 1041409
    %v1080 = vsel %vm1079, %v1078, %v1077
    %vm1081 = vcmask 1043459
    %v1082 = vsel %vm1081, %v1078, %v1080
    %vm1083 = vcmask 1045509
    %v1084 = vsel %vm1083, %v1078, %v1082
    %vm1085 = vcmask 1047559
    %v1086 = vsel %vm1085, %v1078, %v1084
    %1088 = vst [vmem:[#allocation3] sm:$0x3] %v1086
    %v1091 = vsel %vm1074, %v1057, %v1057
    %v1092 = vsel %vm1076, %v1057, %v1091
    %v1093 = vrot.slane %v1065, 7
    %v1094 = vsel %vm1079, %v1093, %v1092
    %v1095 = vsel %vm1081, %v1093, %v1094
    %v1096 = vsel %vm1083, %v1093, %v1095
    %v1097 = vsel %vm1085, %v1093, %v1096
    %1099 = vst [vmem:[#allocation3 + $0x2] sm:$0x3] %v1097
    %v1102 = vsel %vm1074, %v1058, %v1058
    %v1103 = vsel %vm1076, %v1058, %v1102
    %v1104 = vrot.slane %v1066, 7
    %v1105 = vsel %vm1079, %v1104, %v1103
    %v1106 = vsel %vm1081, %v1104, %v1105
    %v1107 = vsel %vm1083, %v1104, %v1106
    %v1108 = vsel %vm1085, %v1104, %v1107
    %1110 = vst [vmem:[#allocation3 + $0x4] sm:$0x3] %v1108
    %v1113 = vsel %vm1074, %v1059, %v1059
    %v1114 = vsel %vm1076, %v1059, %v1113
    %v1115 = vrot.slane %v1067, 7
    %v1116 = vsel %vm1079, %v1115, %v1114
    %v1117 = vsel %vm1081, %v1115, %v1116
    %v1118 = vsel %vm1083, %v1115, %v1117
    %v1119 = vsel %vm1085, %v1115, %v1118
    %1121 = vst [vmem:[#allocation3 + $0x6] sm:$0x3] %v1119
    %v1124 = vsel %vm1074, %v1060, %v1060
    %v1125 = vsel %vm1076, %v1060, %v1124
    %v1126 = vrot.slane %v1068, 7
    %v1127 = vsel %vm1079, %v1126, %v1125
    %v1128 = vsel %vm1081, %v1126, %v1127
    %v1129 = vsel %vm1083, %v1126, %v1128
    %v1130 = vsel %vm1085, %v1126, %v1129
    %1132 = vst [vmem:[#allocation3 + $0x8] sm:$0x3] %v1130
    %v1135 = vsel %vm1074, %v1061, %v1061
    %v1136 = vsel %vm1076, %v1061, %v1135
    %v1137 = vrot.slane %v1069, 7
    %v1138 = vsel %vm1079, %v1137, %v1136
    %v1139 = vsel %vm1081, %v1137, %v1138
    %v1140 = vsel %vm1083, %v1137, %v1139
    %v1141 = vsel %vm1085, %v1137, %v1140
    %1143 = vst [vmem:[#allocation3 + $0xa] sm:$0x3] %v1141
    %v1146 = vsel %vm1074, %v1062, %v1062
    %v1147 = vsel %vm1076, %v1062, %v1146
    %v1148 = vrot.slane %v1070, 7
    %v1149 = vsel %vm1079, %v1148, %v1147
    %v1150 = vsel %vm1081, %v1148, %v1149
    %v1151 = vsel %vm1083, %v1148, %v1150
    %v1152 = vsel %vm1085, %v1148, %v1151
    %1154 = vst [vmem:[#allocation3 + $0xc] sm:$0x3] %v1152
    %v1157 = vsel %vm1074, %v1063, %v1063
    %v1158 = vsel %vm1076, %v1063, %v1157
    %v1159 = vrot.slane %v1071, 7
    %v1160 = vsel %vm1079, %v1159, %v1158
    %v1161 = vsel %vm1081, %v1159, %v1160
    %v1162 = vsel %vm1083, %v1159, %v1161
    %v1163 = vsel %vm1085, %v1159, %v1162
    %1165 = vst [vmem:[#allocation3 + $0xe] sm:$0x3] %v1163
    %v1166 = vld [vmem:[#allocation3] sm:$0xff]
    %v1167 = vld [vmem:[#allocation3 + $0x8] sm:$0xff]
    %v1168 = vld [vmem:[#allocation4] sm:$0xff]
    %v1169 = vld [vmem:[#allocation4 + $0x8] sm:$0xff]
    %v1170 = vld [vmem:[#allocation4 + $0x10] sm:$0xff]
    %v1171 = vld [vmem:[#allocation4 + $0x18] sm:$0xff]
    %v1172 = vld [vmem:[#allocation4 + $0x20] sm:$0xff]
    %v1173 = vld [vmem:[#allocation4 + $0x28] sm:$0xff]
    %v1174 = vld [vmem:[#allocation4 + $0x30] sm:$0xff]
    %v1175 = vld [vmem:[#allocation4 + $0x38] sm:$0xff]
    %v1176 = vld [vmem:[#allocation4 + $0x40] sm:$0xff]
    %v1177 = vld [vmem:[#allocation4 + $0x48] sm:$0xff]
    %v1178 = vld [vmem:[#allocation4 + $0x50] sm:$0xff]
    %v1179 = vld [vmem:[#allocation4 + $0x58] sm:$0xff]
    %v1180 = vld [vmem:[#allocation4 + $0x60] sm:$0xff]
    %v1181 = vld [vmem:[#allocation4 + $0x68] sm:$0xff]
    %v1182 = vld [vmem:[#allocation4 + $0x70] sm:$0xff]
    %v1183 = vld [vmem:[#allocation4 + $0x78] sm:$0xff]
    %v1184 = vld [vmem:[#allocation4 + $0x80] sm:$0xff]
    %v1185 = vld [vmem:[#allocation4 + $0x88] sm:$0xff]
    %v1186 = vld [vmem:[#allocation4 + $0x90] sm:$0xff]
    %v1187 = vld [vmem:[#allocation4 + $0x98] sm:$0xff]
    %v1188 = vld [vmem:[#allocation4 + $0xa0] sm:$0xff]
    %v1189 = vld [vmem:[#allocation4 + $0xa8] sm:$0xff]
    %v1190 = vld [vmem:[#allocation4 + $0xb0] sm:$0xff]
    %v1191 = vld [vmem:[#allocation4 + $0xb8] sm:$0xff]
    %v1192 = vld [vmem:[#allocation4 + $0xc0] sm:$0xff]
    %v1193 = vld [vmem:[#allocation4 + $0xc8] sm:$0xff]
    %v1194 = vld [vmem:[#allocation4 + $0xd0] sm:$0xff]
    %v1195 = vld [vmem:[#allocation4 + $0xd8] sm:$0xff]
    %v1196 = vld [vmem:[#allocation4 + $0xe0] sm:$0xff]
    %v1197 = vld [vmem:[#allocation4 + $0xe8] sm:$0xff]
    %v1198 = vld [vmem:[#allocation4 + $0xf0] sm:$0xff]
    %v1199 = vld [vmem:[#allocation4 + $0xf8] sm:$0xff]
    %v1200 = vld [vmem:[#allocation4 + $0x100] sm:$0xff]
    %v1201 = vld [vmem:[#allocation4 + $0x108] sm:$0xff]
    %v1202 = vld [vmem:[#allocation4 + $0x110] sm:$0xff]
    %v1203 = vld [vmem:[#allocation4 + $0x118] sm:$0xff]
    %v1204 = vld [vmem:[#allocation4 + $0x120] sm:$0xff]
    %v1205 = vld [vmem:[#allocation4 + $0x128] sm:$0xff]
    %v1206 = vld [vmem:[#allocation4 + $0x130] sm:$0xff]
    %v1207 = vld [vmem:[#allocation4 + $0x138] sm:$0xff]
    %v1208 = vld [vmem:[#allocation4 + $0x140] sm:$0xff]
    %v1209 = vld [vmem:[#allocation4 + $0x148] sm:$0xff]
    %v1210 = vld [vmem:[#allocation4 + $0x150] sm:$0xff]
    %v1211 = vld [vmem:[#allocation4 + $0x158] sm:$0xff]
    %v1212 = vld [vmem:[#allocation4 + $0x160] sm:$0xff]
    %v1213 = vld [vmem:[#allocation4 + $0x168] sm:$0xff]
    %v1214 = vld [vmem:[#allocation4 + $0x170] sm:$0xff]
    %v1215 = vld [vmem:[#allocation4 + $0x178] sm:$0xff]
    %v1216 = vld [vmem:[#allocation4 + $0x180] sm:$0xff]
    %v1217 = vld [vmem:[#allocation4 + $0x188] sm:$0xff]
    %v1218 = vld [vmem:[#allocation4 + $0x190] sm:$0xff]
    %v1219 = vld [vmem:[#allocation4 + $0x198] sm:$0xff]
    %v1220 = vld [vmem:[#allocation4 + $0x1a0] sm:$0xff]
    %v1221 = vld [vmem:[#allocation4 + $0x1a8] sm:$0xff]
    %v1222 = vld [vmem:[#allocation4 + $0x1b0] sm:$0xff]
    %v1223 = vld [vmem:[#allocation4 + $0x1b8] sm:$0xff]
    %v1224 = vld [vmem:[#allocation4 + $0x1c0] sm:$0xff]
    %v1225 = vld [vmem:[#allocation4 + $0x1c8] sm:$0xff]
    %v1226 = vld [vmem:[#allocation4 + $0x1d0] sm:$0xff]
    %v1227 = vld [vmem:[#allocation4 + $0x1d8] sm:$0xff]
    %v1228 = vld [vmem:[#allocation4 + $0x1e0] sm:$0xff]
    %v1229 = vld [vmem:[#allocation4 + $0x1e8] sm:$0xff]
    %v1230 = vld [vmem:[#allocation4 + $0x1f0] sm:$0xff]
    %v1231 = vld [vmem:[#allocation4 + $0x1f8] sm:$0xff]
    %v1232 = vld [vmem:[#allocation4 + $0x200] sm:$0xff]
    %v1233 = vld [vmem:[#allocation4 + $0x208] sm:$0xff]
    %v1234 = vld [vmem:[#allocation4 + $0x210] sm:$0xff]
    %v1235 = vld [vmem:[#allocation4 + $0x218] sm:$0xff]
    %v1236 = vld [vmem:[#allocation4 + $0x220] sm:$0xff]
    %v1237 = vld [vmem:[#allocation4 + $0x228] sm:$0xff]
    %v1238 = vld [vmem:[#allocation4 + $0x230] sm:$0xff]
    %v1239 = vld [vmem:[#allocation4 + $0x238] sm:$0xff]
    %v1240 = vld [vmem:[#allocation4 + $0x240] sm:$0xff]
    %v1241 = vld [vmem:[#allocation4 + $0x248] sm:$0xff]
    %v1242 = vld [vmem:[#allocation4 + $0x250] sm:$0xff]
    %v1243 = vld [vmem:[#allocation4 + $0x258] sm:$0xff]
    %v1244 = vld [vmem:[#allocation4 + $0x260] sm:$0xff]
    %v1245 = vld [vmem:[#allocation4 + $0x268] sm:$0xff]
    %v1246 = vld [vmem:[#allocation4 + $0x270] sm:$0xff]
    %v1247 = vld [vmem:[#allocation4 + $0x278] sm:$0xff]
    %v1248 = vld [vmem:[#allocation4 + $0x280] sm:$0xff]
    %v1249 = vld [vmem:[#allocation4 + $0x288] sm:$0xff]
    %v1250 = vld [vmem:[#allocation4 + $0x290] sm:$0xff]
    %v1251 = vld [vmem:[#allocation4 + $0x298] sm:$0xff]
    %v1252 = vld [vmem:[#allocation4 + $0x2a0] sm:$0xff]
    %v1253 = vld [vmem:[#allocation4 + $0x2a8] sm:$0xff]
    %v1254 = vld [vmem:[#allocation4 + $0x2b0] sm:$0xff]
    %v1255 = vld [vmem:[#allocation4 + $0x2b8] sm:$0xff]
    %v1256 = vld [vmem:[#allocation4 + $0x2c0] sm:$0xff]
    %v1257 = vld [vmem:[#allocation4 + $0x2c8] sm:$0xff]
    %v1258 = vld [vmem:[#allocation4 + $0x2d0] sm:$0xff]
    %v1259 = vld [vmem:[#allocation4 + $0x2d8] sm:$0xff]
    %v1260 = vld [vmem:[#allocation4 + $0x2e0] sm:$0xff]
    %v1261 = vld [vmem:[#allocation4 + $0x2e8] sm:$0xff]
    %v1262 = vld [vmem:[#allocation4 + $0x2f0] sm:$0xff]
    %v1263 = vld [vmem:[#allocation4 + $0x2f8] sm:$0xff]
    %v1264 = vld [vmem:[#allocation4 + $0x300] sm:$0xff]
    %v1265 = vld [vmem:[#allocation4 + $0x308] sm:$0xff]
    %v1266 = vld [vmem:[#allocation4 + $0x310] sm:$0xff]
    %v1267 = vld [vmem:[#allocation4 + $0x318] sm:$0xff]
    %v1268 = vld [vmem:[#allocation4 + $0x320] sm:$0xff]
    %v1269 = vld [vmem:[#allocation4 + $0x328] sm:$0xff]
    %v1270 = vld [vmem:[#allocation4 + $0x330] sm:$0xff]
    %v1271 = vld [vmem:[#allocation4 + $0x338] sm:$0xff]
    %v1272 = vld [vmem:[#allocation4 + $0x340] sm:$0xff]
    %v1273 = vld [vmem:[#allocation4 + $0x348] sm:$0xff]
    %v1274 = vld [vmem:[#allocation4 + $0x350] sm:$0xff]
    %v1275 = vld [vmem:[#allocation4 + $0x358] sm:$0xff]
    %v1276 = vld [vmem:[#allocation4 + $0x360] sm:$0xff]
    %v1277 = vld [vmem:[#allocation4 + $0x368] sm:$0xff]
    %v1278 = vld [vmem:[#allocation4 + $0x370] sm:$0xff]
    %v1279 = vld [vmem:[#allocation4 + $0x378] sm:$0xff]
    %v1280 = vld [vmem:[#allocation4 + $0x380] sm:$0xff]
    %v1281 = vld [vmem:[#allocation4 + $0x388] sm:$0xff]
    %v1282 = vld [vmem:[#allocation4 + $0x390] sm:$0xff]
    %v1283 = vld [vmem:[#allocation4 + $0x398] sm:$0xff]
    %v1284 = vld [vmem:[#allocation4 + $0x3a0] sm:$0xff]
    %v1285 = vld [vmem:[#allocation4 + $0x3a8] sm:$0xff]
    %v1286 = vld [vmem:[#allocation4 + $0x3b0] sm:$0xff]
    %v1287 = vld [vmem:[#allocation4 + $0x3b8] sm:$0xff]
    %v1288 = vld [vmem:[#allocation4 + $0x3c0] sm:$0xff]
    %v1289 = vld [vmem:[#allocation4 + $0x3c8] sm:$0xff]
    %v1290 = vld [vmem:[#allocation4 + $0x3d0] sm:$0xff]
    %v1291 = vld [vmem:[#allocation4 + $0x3d8] sm:$0xff]
    %v1292 = vld [vmem:[#allocation4 + $0x3e0] sm:$0xff]
    %v1293 = vld [vmem:[#allocation4 + $0x3e8] sm:$0xff]
    %v1294 = vld [vmem:[#allocation4 + $0x3f0] sm:$0xff]
    %v1295 = vld [vmem:[#allocation4 + $0x3f8] sm:$0xff]
    %v1296 = vld [vmem:[%s12] sm:$0x1]
    %v1298 = vperm.slane %v1296, 0
    %1302 = vst [vmem:[#allocation1] ss:$4 sm:$0xff] %v1166
    %s1303 = scalar_lea.vmem [#allocation1], 32
    %1304 = vst [vmem:[%s1303] ss:$4 sm:$0xff] %v1167
    %v1305 = vld.sshfl [vmem:[#allocation1] sm:$0xff pattern:$0x73625140]
    %v1306 = vld.sshfl [vmem:[#allocation1 + $0x8] sm:$0xff pattern:$0x73625140]
    %v1307 = vld.sshfl [vmem:[#allocation1 + $0x10] sm:$0xff pattern:$0x73625140]
    %v1308 = vld.sshfl [vmem:[#allocation1 + $0x18] sm:$0xff pattern:$0x73625140]
    %v1309 = vld.sshfl [vmem:[#allocation1 + $0x20] sm:$0xff pattern:$0x73625140]
    %v1310 = vld.sshfl [vmem:[#allocation1 + $0x28] sm:$0xff pattern:$0x73625140]
    %v1311 = vld.sshfl [vmem:[#allocation1 + $0x30] sm:$0xff pattern:$0x73625140]
    %v1312 = vld.sshfl [vmem:[#allocation1 + $0x38] sm:$0xff pattern:$0x73625140]
    %1321 = vmatpush.msra.mxu0 %v1183
    %1322 = vmatpush.msra.mxu0 %v1182
    %1323 = vmatpush.msra.mxu0 %v1181
    %1324 = vmatpush.msra.mxu0 %v1180
    %1325 = vmatpush.msra.mxu0 %v1179
    %1326 = vmatpush.msra.mxu0 %v1178
    %1327 = vmatpush.msra.mxu0 %v1177
    %1328 = vmatpush.msra.mxu0 %v1176
    %1329 = vmatpush.msra.mxu0 %v1175
    %1330 = vmatpush.msra.mxu0 %v1174
    %1331 = vmatpush.msra.mxu0 %v1173
    %1332 = vmatpush.msra.mxu0 %v1172
    %1333 = vmatpush.msra.mxu0 %v1171
    %1334 = vmatpush.msra.mxu0 %v1170
    %1335 = vmatpush.msra.mxu0 %v1169
    %1336 = vmatpush.msra.mxu0 %v1168
    %1337 = vmatmul.f32.gmra.mxu0 %v1305
    %v1338 = vpop.f32.mrf.mxu0
    %v1339 = vadd.f32 %v1298, %v1338
    %1340 = vdwg.mxu0
    %1341 = vmatpush.msra.mxu0 %v1199
    %1342 = vmatpush.msra.mxu0 %v1198
    %1343 = vmatpush.msra.mxu0 %v1197
    %1344 = vmatpush.msra.mxu0 %v1196
    %1345 = vmatpush.msra.mxu0 %v1195
    %1346 = vmatpush.msra.mxu0 %v1194
    %1347 = vmatpush.msra.mxu0 %v1193
    %1348 = vmatpush.msra.mxu0 %v1192
    %1349 = vmatpush.msra.mxu0 %v1191
    %1350 = vmatpush.msra.mxu0 %v1190
    %1351 = vmatpush.msra.mxu0 %v1189
    %1352 = vmatpush.msra.mxu0 %v1188
    %1353 = vmatpush.msra.mxu0 %v1187
    %1354 = vmatpush.msra.mxu0 %v1186
    %1355 = vmatpush.msra.mxu0 %v1185
    %1356 = vmatpush.msra.mxu0 %v1184
    %1357 = vmatmul.f32.gmra.mxu0 %v1306
    %v1358 = vpop.f32.mrf.mxu0
    %v1359 = vadd.f32 %v1339, %v1358
    %1360 = vdwg.mxu0
    %1361 = vmatpush.msra.mxu0 %v1215
    %1362 = vmatpush.msra.mxu0 %v1214
    %1363 = vmatpush.msra.mxu0 %v1213
    %1364 = vmatpush.msra.mxu0 %v1212
    %1365 = vmatpush.msra.mxu0 %v1211
    %1366 = vmatpush.msra.mxu0 %v1210
    %1367 = vmatpush.msra.mxu0 %v1209
    %1368 = vmatpush.msra.mxu0 %v1208
    %1369 = vmatpush.msra.mxu0 %v1207
    %1370 = vmatpush.msra.mxu0 %v1206
    %1371 = vmatpush.msra.mxu0 %v1205
    %1372 = vmatpush.msra.mxu0 %v1204
    %1373 = vmatpush.msra.mxu0 %v1203
    %1374 = vmatpush.msra.mxu0 %v1202
    %1375 = vmatpush.msra.mxu0 %v1201
    %1376 = vmatpush.msra.mxu0 %v1200
    %1377 = vmatmul.f32.gmra.mxu0 %v1307
    %v1378 = vpop.f32.mrf.mxu0
    %v1379 = vadd.f32 %v1359, %v1378
    %1380 = vdwg.mxu0
    %1381 = vmatpush.msra.mxu0 %v1231
    %1382 = vmatpush.msra.mxu0 %v1230
    %1383 = vmatpush.msra.mxu0 %v1229
    %1384 = vmatpush.msra.mxu0 %v1228
    %1385 = vmatpush.msra.mxu0 %v1227
    %1386 = vmatpush.msra.mxu0 %v1226
    %1387 = vmatpush.msra.mxu0 %v1225
    %1388 = vmatpush.msra.mxu0 %v1224
    %1389 = vmatpush.msra.mxu0 %v1223
    %1390 = vmatpush.msra.mxu0 %v1222
    %1391 = vmatpush.msra.mxu0 %v1221
    %1392 = vmatpush.msra.mxu0 %v1220
    %1393 = vmatpush.msra.mxu0 %v1219
    %1394 = vmatpush.msra.mxu0 %v1218
    %1395 = vmatpush.msra.mxu0 %v1217
    %1396 = vmatpush.msra.mxu0 %v1216
    %1397 = vmatmul.f32.gmra.mxu0 %v1308
    %v1398 = vpop.f32.mrf.mxu0
    %v1399 = vadd.f32 %v1379, %v1398
    %1400 = vdwg.mxu0
    %1401 = vmatpush.msra.mxu0 %v1247
    %1402 = vmatpush.msra.mxu0 %v1246
    %1403 = vmatpush.msra.mxu0 %v1245
    %1404 = vmatpush.msra.mxu0 %v1244
    %1405 = vmatpush.msra.mxu0 %v1243
    %1406 = vmatpush.msra.mxu0 %v1242
    %1407 = vmatpush.msra.mxu0 %v1241
    %1408 = vmatpush.msra.mxu0 %v1240
    %1409 = vmatpush.msra.mxu0 %v1239
    %1410 = vmatpush.msra.mxu0 %v1238
    %1411 = vmatpush.msra.mxu0 %v1237
    %1412 = vmatpush.msra.mxu0 %v1236
    %1413 = vmatpush.msra.mxu0 %v1235
    %1414 = vmatpush.msra.mxu0 %v1234
    %1415 = vmatpush.msra.mxu0 %v1233
    %1416 = vmatpush.msra.mxu0 %v1232
    %1417 = vmatmul.f32.gmra.mxu0 %v1309
    %v1418 = vpop.f32.mrf.mxu0
    %v1419 = vadd.f32 %v1399, %v1418
    %1420 = vdwg.mxu0
    %1421 = vmatpush.msra.mxu0 %v1263
    %1422 = vmatpush.msra.mxu0 %v1262
    %1423 = vmatpush.msra.mxu0 %v1261
    %1424 = vmatpush.msra.mxu0 %v1260
    %1425 = vmatpush.msra.mxu0 %v1259
    %1426 = vmatpush.msra.mxu0 %v1258
    %1427 = vmatpush.msra.mxu0 %v1257
    %1428 = vmatpush.msra.mxu0 %v1256
    %1429 = vmatpush.msra.mxu0 %v1255
    %1430 = vmatpush.msra.mxu0 %v1254
    %1431 = vmatpush.msra.mxu0 %v1253
    %1432 = vmatpush.msra.mxu0 %v1252
    %1433 = vmatpush.msra.mxu0 %v1251
    %1434 = vmatpush.msra.mxu0 %v1250
    %1435 = vmatpush.msra.mxu0 %v1249
    %1436 = vmatpush.msra.mxu0 %v1248
    %1437 = vmatmul.f32.gmra.mxu0 %v1310
    %v1438 = vpop.f32.mrf.mxu0
    %v1439 = vadd.f32 %v1419, %v1438
    %1440 = vdwg.mxu0
    %1441 = vmatpush.msra.mxu0 %v1279
    %1442 = vmatpush.msra.mxu0 %v1278
    %1443 = vmatpush.msra.mxu0 %v1277
    %1444 = vmatpush.msra.mxu0 %v1276
    %1445 = vmatpush.msra.mxu0 %v1275
    %1446 = vmatpush.msra.mxu0 %v1274
    %1447 = vmatpush.msra.mxu0 %v1273
    %1448 = vmatpush.msra.mxu0 %v1272
    %1449 = vmatpush.msra.mxu0 %v1271
    %1450 = vmatpush.msra.mxu0 %v1270
    %1451 = vmatpush.msra.mxu0 %v1269
    %1452 = vmatpush.msra.mxu0 %v1268
    %1453 = vmatpush.msra.mxu0 %v1267
    %1454 = vmatpush.msra.mxu0 %v1266
    %1455 = vmatpush.msra.mxu0 %v1265
    %1456 = vmatpush.msra.mxu0 %v1264
    %1457 = vmatmul.f32.gmra.mxu0 %v1311
    %v1458 = vpop.f32.mrf.mxu0
    %v1459 = vadd.f32 %v1439, %v1458
    %1460 = vdwg.mxu0
    %1461 = vmatpush.msra.mxu0 %v1295
    %1462 = vmatpush.msra.mxu0 %v1294
    %1463 = vmatpush.msra.mxu0 %v1293
    %1464 = vmatpush.msra.mxu0 %v1292
    %1465 = vmatpush.msra.mxu0 %v1291
    %1466 = vmatpush.msra.mxu0 %v1290
    %1467 = vmatpush.msra.mxu0 %v1289
    %1468 = vmatpush.msra.mxu0 %v1288
    %1469 = vmatpush.msra.mxu0 %v1287
    %1470 = vmatpush.msra.mxu0 %v1286
    %1471 = vmatpush.msra.mxu0 %v1285
    %1472 = vmatpush.msra.mxu0 %v1284
    %1473 = vmatpush.msra.mxu0 %v1283
    %1474 = vmatpush.msra.mxu0 %v1282
    %1475 = vmatpush.msra.mxu0 %v1281
    %1476 = vmatpush.msra.mxu0 %v1280
    %1477 = vmatmul.f32.gmra.mxu0 %v1312
    %v1478 = vpop.f32.mrf.mxu0
    %v1479 = vadd.f32 %v1459, %v1478
    %1480 = vdwg.mxu0
    %vm1481 = vcmask 74752
    %1482 = vst.msk [vmem:[#allocation7] sm:$0x3] %vm1481, %v1479
    // Predicated region
    $region58: #{_lambda_.1} parent=1 // pred_check
      _
    $region59: #{_lambda_.1} parent=1 // pred_check_branch
      %1484 = sbr.rel (0) target = $region61
    $region60: #{_lambda_.1} parent=1 // pred_region
      %1486 = vsyncadd [#allocation6], 0
      %s1488 = sshll.u32 [#allocation7], 4
      %s1489 = int_to_ptr.vmem [resolvable:$true] %s1488
      %s1490 = sshll.u32 %s13, 4
      %s1491 = int_to_ptr.hbm [resolvable:$true] %s1490
      %1493 = dma.vmem_to_hbm [thread:$0]  %s1489, 32, %s1491, [#allocation6]
    $region61: #{_lambda_.1} parent=1 // pred_fallthru
      _
    // Predicated region
    $region62: #{_lambda_.1} parent=1 // pred_check
      _
    $region63: #{_lambda_.1} parent=1 // pred_check_branch
      %1495 = sbr.rel (0) target = $region65
    $region64: #{_lambda_.1} parent=1 // pred_region
      %1497 = dma.done [#allocation6], 32
    $region65: #{_lambda_.1} parent=1 // pred_fallthru
      _
    %1498 = vsyncpa [#allocation5], 1
    %1499 = vsyncpa [#allocation6], 1

</llo_original>
